<compile_context>
chip_gen: v5e
topology: v5e:2x2
jax: 0.10.0
libtpu: 0.0.40
codegen_flags: <defaults>
</compile_context>

<pallas_src>
import functools

import numpy as np
import jax
import jax.numpy as jnp
from jax.experimental import pallas as pl
from jax.experimental.pallas import tpu as pltpu


BN_EPS = 0.8
LRELU_SLOPE = 0.2


def _round_up(x, m):
    return ((x + m - 1) // m) * m


# ----------------------------- fused Pallas kernel ---------------------------

def _featurizer_kernel(p1_ref, s_ref, w_ref, l_ref, o_ref, patch_ref, *, cfg):
    eps = cfg["eps"]
    slope = cfg["slope"]

    def leaky(x):
        return jnp.where(x >= 0.0, x, slope * x)

    def vrow(r, width):                       # one packed per-channel vector
        return l_ref[r:r + 1, 0:width]        # (1, width) -> broadcasts over rows

    # ---- Block 1: conv from the XLA-built im2col patches + bias + LeakyReLU
    #      (first discriminator block has no BatchNorm).
    w1 = w_ref[0:cfg["k1p"], 0:cfg["c1"]]
    y = jnp.dot(p1_ref[...], w1, preferred_element_type=jnp.float32)
    y = leaky(y + vrow(cfg["b1_row"], cfg["c1"]))             # [N*(H/2)^2, 16]

    # ---- Blocks 2-4: in-VMEM im2col with ONE tap-gather matmul per block,
    #      ONE conv matmul over K = 9*cin, then fused bias + LeakyReLU +
    #      training-mode BatchNorm (single sum / sum-sq reduction pass).
    for blk in cfg["blocks"]:
        cin, cout = blk["cin"], blk["cout"]
        r_out, r_pad = blk["r_out"], blk["r_pad"]

        sel = s_ref[blk["s_row0"]:blk["s_row1"], 0:blk["r_in"]]      # [9*r_pad, r_in]
        taps = jnp.dot(sel, y, preferred_element_type=jnp.float32)   # [9*r_pad, cin]

        # Re-pack the 9 stacked tap blocks into the [r_out, 9*cin] patch tile
        # (static value slices + static lane-slot stores into a VMEM scratch).
        for k in range(9):                                           # static unroll
            patch_ref[0:r_out, k * cin:(k + 1) * cin] = (
                taps[k * r_pad:k * r_pad + r_out, :])
        patches = patch_ref[0:r_out, 0:9 * cin]                      # [r_out, 9*cin]

        wf = w_ref[blk["w_row0"]:blk["w_row1"], 0:cout]              # [9*cin, cout]
        z = jnp.dot(patches, wf, preferred_element_type=jnp.float32)
        z = leaky(z + vrow(blk["b_row"], cout))
        # Dropout2d(p=0) == identity.

        # Training-mode BatchNorm over rows (= N*H*W), one fused reduce pass.
        inv_n = 1.0 / float(r_out)
        m1 = jnp.sum(z, axis=0, keepdims=True) * inv_n
        m2 = jnp.sum(z * z, axis=0, keepdims=True) * inv_n
        y = ((z - m1) * jax.lax.rsqrt(m2 - m1 * m1 + eps)
             * vrow(blk["b_row"] + 1, cout) + vrow(blk["b_row"] + 2, cout))

    # ---- flatten + Linear.  ds_size == 1: rows are already the batch index and
    #      columns the 128 channels, which matches PyTorch's view(N, -1).
    # TODO(synk): for img_size > 16 (ds_size > 1) the flatten order would need a
    # channels-first reordering of the Linear weight rows in the wrapper.
    wl = l_ref[0:cfg["dflat"], :]                                    # [128, 384]
    out = (jnp.dot(y, wl, preferred_element_type=jnp.float32)
           + vrow(cfg["bl_row"], cfg["nlin_pad"]))
    o_ref[...] = out.astype(o_ref.dtype)                             # lane-dense store


# ----------------------- static layout / selection matrices ------------------

def _selection_block(n_batch, hi, r_pad):
    """0/1 tap-gather matrix for a 3x3 / stride-2 / pad-1 conv on an (hi x hi)
    feature map whose rows are flattened as (n, h, w).  Row k*r_pad + r selects
    the input row feeding tap k of output row r; padding taps and padded rows
    stay all-zero (== the conv's zero padding)."""
    ho = hi // 2
    sel = np.zeros((9 * r_pad, n_batch * hi * hi), np.float32)
    for k in range(9):
        kh, kw = divmod(k, 3)
        for n in range(n_batch):
            for oh in range(ho):
                for ow in range(ho):
                    ih, iw = 2 * oh + kh - 1, 2 * ow + kw - 1
                    if 0 <= ih < hi and 0 <= iw < hi:
                        r = (n * ho + oh) * ho + ow
                        sel[k * r_pad + r, (n * hi + ih) * hi + iw] = 1.0
    return sel


def _build_static(n_batch, channels, img_size, n_lin=300):
    """Static packing layout (Python ints) + selection-matrix constants."""
    assert img_size % 16 == 0, "ds_size = img_size // 16 must be >= 1"
    k1p = _round_up(9 * channels, 8)

    blocks = []
    s_row, w_row = 0, k1p
    for i, (cin, cout) in enumerate([(16, 32), (32, 64), (64, 128)]):
        hi = img_size // 2 ** (i + 1)
        ho = hi // 2
        r_out = n_batch * ho * ho
        r_pad = _round_up(r_out, 8)
        blocks.append(dict(hi=hi, cin=cin, cout=cout,
                           r_in=n_batch * hi * hi, r_out=r_out, r_pad=r_pad,
                           s_row0=s_row, s_row1=s_row + 9 * r_pad,
                           w_row0=w_row, w_row1=w_row + 9 * cin))
        s_row += 9 * r_pad
        w_row += 9 * cin

    ds = img_size // 16
    dflat = 128 * ds * ds
    voff = dflat
    for i, blk in enumerate(blocks):
        blk["b_row"] = voff + 1 + 3 * i
    nlin_pad = _round_up(n_lin, 128)

    # Batch-block-diagonal tap-gather matrices, packed into one operand.
    # TODO(synk): these scale O(N^2); for large batches switch to per-image
    # selection dots (O(N)) or a batch grid -- blocked here because training
    # mode BatchNorm couples the whole batch at every layer.
    s_cols = _round_up(max(b["r_in"] for b in blocks), 128)
    s_all = np.zeros((_round_up(s_row, 8), s_cols), np.float32)
    for blk in blocks:
        s_all[blk["s_row0"]:blk["s_row1"], 0:blk["r_in"]] = _selection_block(
            n_batch, blk["hi"], blk["r_pad"])

    w_rows = _round_up(w_row, 8)
    l_rows = _round_up(voff + 11, 8)

    # Advisory cost estimate for XLA's scheduler.
    r1 = n_batch * (img_size // 2) ** 2
    flops = 2 * r1 * k1p * 16
    for blk in blocks:
        flops += 2 * ((blk["s_row1"] - blk["s_row0"]) * blk["r_in"] * blk["cin"]
                      + blk["r_out"] * 9 * blk["cin"] * blk["cout"])
    flops += 2 * n_batch * dflat * nlin_pad
    transc = sum(blk["cout"] for blk in blocks)           # one rsqrt per channel
    bytes_acc = 4 * (r1 * k1p + s_all.size + w_rows * 128
                     + l_rows * nlin_pad + n_batch * nlin_pad)

    cfg = dict(eps=BN_EPS, slope=LRELU_SLOPE, k1p=k1p, c1=16,
               dflat=dflat, nlin_pad=nlin_pad, blocks=blocks,
               b1_row=voff, bl_row=voff + 10,
               w_rows=w_rows, l_rows=l_rows,
               patch_rows=max(b["r_pad"] for b in blocks),
               patch_cols=max(9 * b["cin"] for b in blocks),
               flops=int(flops), transc=int(transc), bytes=int(bytes_acc))
    return cfg, s_all


# ------------------------------ JAX-side glue ---------------------------------

def _im2col_k3_s2_p1(x_nhwc, k_pad):
    """3x3 / stride-2 / pad-1 patches of the network input -> [N*Ho*Wo, k_pad]."""
    N, H, W, C = x_nhwc.shape
    Ho = (H + 2 - 3) // 2 + 1
    Wo = (W + 2 - 3) // 2 + 1
    xp = jnp.pad(x_nhwc, ((0, 0), (1, 1), (1, 1), (0, 0)))
    cols = []
    for kh in range(3):
        for kw in range(3):
            cols.append(xp[:, kh:kh + 2 * (Ho - 1) + 1:2,
                           kw:kw + 2 * (Wo - 1) + 1:2, :])
    patches = jnp.concatenate(cols, axis=-1).reshape(N * Ho * Wo, 9 * C)
    if k_pad > 9 * C:
        patches = jnp.pad(patches, ((0, 0), (0, k_pad - 9 * C)))
    return patches


def featurizer_forward(img_nchw, params):
    (w1, b1), (w2, b2, g2, be2), (w3, b3, g3, be3), (w4, b4, g4, be4), (wl, bl) = params
    n_batch, channels, img_size, _ = img_nchw.shape
    cfg, s_all_np = _build_static(n_batch, channels, img_size, n_lin=wl.shape[1])

    # ---- operand packing (cheap XLA ops, fused into the surrounding jit) -----
    x = jnp.transpose(img_nchw, (0, 2, 3, 1)).astype(jnp.float32)    # NCHW -> NHWC
    p1 = _im2col_k3_s2_p1(x, k_pad=cfg["k1p"])                       # [N*(H/2)^2, k1p]

    s_all = jnp.asarray(s_all_np)                                    # one DMA

    w_all = jnp.zeros((cfg["w_rows"], 128), jnp.float32)             # one DMA
    w_all = w_all.at[0:cfg["k1p"], 0:cfg["c1"]].set(w1)
    for blk, w in zip(cfg["blocks"], (w2, w3, w4)):
        w_all = w_all.at[blk["w_row0"]:blk["w_row1"], 0:blk["cout"]].set(
            w.reshape(9 * blk["cin"], blk["cout"]))

    l_all = jnp.zeros((cfg["l_rows"], cfg["nlin_pad"]), jnp.float32)  # one DMA
    l_all = l_all.at[0:cfg["dflat"], 0:wl.shape[1]].set(wl)
    l_all = l_all.at[cfg["b1_row"], 0:b1.shape[0]].set(b1)
    for blk, (b, g, be) in zip(cfg["blocks"],
                               ((b2, g2, be2), (b3, g3, be3), (b4, g4, be4))):
        r = blk["b_row"]
        l_all = l_all.at[r, 0:blk["cout"]].set(b)
        l_all = l_all.at[r + 1, 0:blk["cout"]].set(g)
        l_all = l_all.at[r + 2, 0:blk["cout"]].set(be)
    l_all = l_all.at[cfg["bl_row"], 0:bl.shape[0]].set(bl)

    vmem = pl.BlockSpec(memory_space=pltpu.MemorySpace.VMEM)
    out_pad = pl.pallas_call(
        functools.partial(_featurizer_kernel, cfg=cfg),
        out_shape=jax.ShapeDtypeStruct((n_batch, cfg["nlin_pad"]), jnp.float32),
        in_specs=[vmem, vmem, vmem, vmem],
        out_specs=vmem,
        scratch_shapes=[pltpu.VMEM((cfg["patch_rows"], cfg["patch_cols"]),
                                   jnp.float32)],
        cost_estimate=pl.CostEstimate(flops=cfg["flops"],
                                      transcendentals=cfg["transc"],
                                      bytes_accessed=cfg["bytes"]),
    )(p1, s_all, w_all, l_all)

    return out_pad[:, :wl.shape[1]]          # drop the 300 -> 384 lane padding


# --------------------------- deterministic params -----------------------------

def init_params(key, channels=3, img_size=16):
    ks = jax.random.split(key, 16)
    k1 = 9 * channels
    k1p = _round_up(k1, 8)
    # Layer-1 weight rows ordered (kh, kw, cin) to match im2col column order,
    # zero-padded to a multiple of 8 rows.
    w1 = 0.05 * jax.random.normal(ks[0], (k1, 16), jnp.float32)
    w1 = jnp.pad(w1, ((0, k1p - k1), (0, 0)))
    b1 = 0.01 * jax.random.normal(ks[1], (16,), jnp.float32)
    params = [(w1, b1)]
    ki = 2
    for cin, cout in [(16, 32), (32, 64), (64, 128)]:
        # weight layout [9, Cin, Cout], tap index k = kh*3 + kw
        w = 0.05 * jax.random.normal(ks[ki], (9, cin, cout), jnp.float32); ki += 1
        b = 0.01 * jax.random.normal(ks[ki], (cout,), jnp.float32); ki += 1
        g = 1.0 + 0.1 * jax.random.normal(ks[ki], (cout,), jnp.float32); ki += 1
        be = 0.05 * jax.random.normal(ks[ki], (cout,), jnp.float32); ki += 1
        params.append((w, b, g, be))
    ds = img_size // 16
    wl = 0.05 * jax.random.normal(ks[ki], (128 * ds * ds, 300), jnp.float32); ki += 1
    bl = 0.01 * jax.random.normal(ks[ki], (300,), jnp.float32)
    params.append((wl, bl))
    return tuple(params)


# ------------------------------ pure-JAX reference -----------------------------

def _ref_forward(img_nchw, params, channels, eps=BN_EPS):
    (w1, b1), (w2, b2, g2, be2), (w3, b3, g3, be3), (w4, b4, g4, be4), (wl, bl) = params
    x = jnp.transpose(img_nchw, (0, 2, 3, 1)).astype(jnp.float32)

    def block(x, w_hwio, b, g=None, be=None):
        y = jax.lax.conv_general_dilated(
            x, w_hwio, window_strides=(2, 2), padding=((1, 1), (1, 1)),
            dimension_numbers=("NHWC", "HWIO", "NHWC"))
        y = y + b
        y = jnp.where(y >= 0, y, LRELU_SLOPE * y)
        if g is not None:
            mean = jnp.mean(y, axis=(0, 1, 2), keepdims=True)
            var = jnp.mean(jnp.square(y - mean), axis=(0, 1, 2), keepdims=True)
            y = (y - mean) * jax.lax.rsqrt(var + eps) * g + be
        return y

    x = block(x, w1[:9 * channels].reshape(3, 3, channels, 16), b1)
    x = block(x, w2.reshape(3, 3, *w2.shape[1:]), b2, g2, be2)
    x = block(x, w3.reshape(3, 3, *w3.shape[1:]), b3, g3, be3)
    x = block(x, w4.reshape(3, 3, *w4.shape[1:]), b4, g4, be4)
    flat = x.reshape(x.shape[0], -1)          # ds_size = 1: layout-order no-op
    return flat @ wl + bl


# ---------------------------------- main ---------------------------------------

if __name__ == "__main__":
    N, C, H, W = 2, 3, 16, 16          # opt.channels=3 (CIFAR10), opt.img_size=16
    key = jax.random.PRNGKey(0)
    k_img, k_par = jax.random.split(key)
    img = jax.random.normal(k_img, (N, C, H, W), jnp.float32)
    params = init_params(k_par, channels=C, img_size=H)

    feat = jax.jit(featurizer_forward)(img, params)
    feat = jax.block_until_ready(feat)

    assert feat.shape == (N, 300), feat.shape
    assert bool(jnp.all(jnp.isfinite(feat)))

    ref = _ref_forward(img, params, channels=C)
    max_err = float(jnp.max(jnp.abs(feat - ref)))
    assert max_err < 1e-3, f"mismatch vs conv reference: {max_err}"

    print("KERNEL_OK")
</pallas_src>

<mosaic_0001>
module attributes {stable_mosaic.version = 11 : i64} {
  func.func @_featurizer_kernel(%arg0: memref<128x32xf32, #tpu.memory_space<vmem>>, %arg1: memref<432x128xf32, #tpu.memory_space<vmem>>, %arg2: memref<1040x128xf32, #tpu.memory_space<vmem>>, %arg3: memref<144x384xf32, #tpu.memory_space<vmem>>, %arg4: memref<2x384xf32, #tpu.memory_space<vmem>>, %arg5: memref<32x576xf32, #tpu.memory_space<vmem>>) attributes {dimension_semantics = [], scalar_prefetch = 0 : i64, scratch_operands = 1 : i64, tpu.core_type = #tpu.core_type<tc>} {
    %c0 = arith.constant 0 : index
    %c0_0 = arith.constant 0 : index
    %0 = vector.load %arg2[%c0, %c0_0] : memref<1040x128xf32, #tpu.memory_space<vmem>>, vector<32x16xf32>
    %c0_1 = arith.constant 0 : index
    %c0_2 = arith.constant 0 : index
    %1 = vector.load %arg0[%c0_1, %c0_2] : memref<128x32xf32, #tpu.memory_space<vmem>>, vector<128x32xf32>
    %cst = arith.constant dense<0.000000e+00> : vector<128x16xf32>
    %2 = tpu.matmul %1, %0, %cst {dimension_numbers = #tpu.dot_dimension_numbers<[1], [0], [0], [1], [0, 0, 1, 1], [], []>} : vector<128x32xf32>, vector<32x16xf32>, vector<128x16xf32> -> vector<128x16xf32>
    %c128 = arith.constant 128 : index
    %c0_3 = arith.constant 0 : index
    %3 = vector.load %arg3[%c128, %c0_3] : memref<144x384xf32, #tpu.memory_space<vmem>>, vector<1x16xf32>
    %4 = vector.broadcast %3 : vector<1x16xf32> to vector<128x16xf32>
    %5 = arith.addf %2, %4 : vector<128x16xf32>
    %cst_4 = arith.constant 0.000000e+00 : f32
    %6 = vector.broadcast %cst_4 : f32 to vector<128x16xf32>
    %7 = arith.cmpf oge, %5, %6 : vector<128x16xf32>
    %cst_5 = arith.constant 2.000000e-01 : f32
    %8 = vector.broadcast %cst_5 : f32 to vector<128x16xf32>
    %9 = arith.mulf %8, %5 : vector<128x16xf32>
    %10 = arith.select %7, %5, %9 : vector<128x16xi1>, vector<128x16xf32>
    %c0_6 = arith.constant 0 : index
    %c0_7 = arith.constant 0 : index
    %11 = vector.load %arg1[%c0_6, %c0_7] : memref<432x128xf32, #tpu.memory_space<vmem>>, vector<288x128xf32>
    %cst_8 = arith.constant dense<0.000000e+00> : vector<288x16xf32>
    %12 = tpu.matmul %11, %10, %cst_8 {dimension_numbers = #tpu.dot_dimension_numbers<[1], [0], [0], [1], [0, 0, 1, 1], [], []>} : vector<288x128xf32>, vector<128x16xf32>, vector<288x16xf32> -> vector<288x16xf32>
    %13 = vector.extract_strided_slice %12 {offsets = [0, 0], sizes = [32, 16], strides = [1, 1]} : vector<288x16xf32> to vector<32x16xf32>
    %c0_9 = arith.constant 0 : index
    %c0_10 = arith.constant 0 : index
    %14 = vector.load %arg5[%c0_9, %c0_10] : memref<32x576xf32, #tpu.memory_space<vmem>>, vector<32x16xf32>
    tpu.vector_store %arg5[%c0_9, %c0_10], %13 {strides = array<i32>} : memref<32x576xf32, #tpu.memory_space<vmem>>, vector<32x16xf32>,
    %15 = vector.extract_strided_slice %12 {offsets = [32, 0], sizes = [32, 16], strides = [1, 1]} : vector<288x16xf32> to vector<32x16xf32>
    %c0_11 = arith.constant 0 : index
    %c16 = arith.constant 16 : index
    %16 = vector.load %arg5[%c0_11, %c16] : memref<32x576xf32, #tpu.memory_space<vmem>>, vector<32x16xf32>
    tpu.vector_store %arg5[%c0_11, %c16], %15 {strides = array<i32>} : memref<32x576xf32, #tpu.memory_space<vmem>>, vector<32x16xf32>,
    %17 = vector.extract_strided_slice %12 {offsets = [64, 0], sizes = [32, 16], strides = [1, 1]} : vector<288x16xf32> to vector<32x16xf32>
    %c0_12 = arith.constant 0 : index
    %c32 = arith.constant 32 : index
    %18 = vector.load %arg5[%c0_12, %c32] : memref<32x576xf32, #tpu.memory_space<vmem>>, vector<32x16xf32>
    tpu.vector_store %arg5[%c0_12, %c32], %17 {strides = array<i32>} : memref<32x576xf32, #tpu.memory_space<vmem>>, vector<32x16xf32>,
    %19 = vector.extract_strided_slice %12 {offsets = [96, 0], sizes = [32, 16], strides = [1, 1]} : vector<288x16xf32> to vector<32x16xf32>
    %c0_13 = arith.constant 0 : index
    %c48 = arith.constant 48 : index
    %20 = vector.load %arg5[%c0_13, %c48] : memref<32x576xf32, #tpu.memory_space<vmem>>, vector<32x16xf32>
    tpu.vector_store %arg5[%c0_13, %c48], %19 {strides = array<i32>} : memref<32x576xf32, #tpu.memory_space<vmem>>, vector<32x16xf32>,
    %21 = vector.extract_strided_slice %12 {offsets = [128, 0], sizes = [32, 16], strides = [1, 1]} : vector<288x16xf32> to vector<32x16xf32>
    %c0_14 = arith.constant 0 : index
    %c64 = arith.constant 64 : index
    %22 = vector.load %arg5[%c0_14, %c64] : memref<32x576xf32, #tpu.memory_space<vmem>>, vector<32x16xf32>
    tpu.vector_store %arg5[%c0_14, %c64], %21 {strides = array<i32>} : memref<32x576xf32, #tpu.memory_space<vmem>>, vector<32x16xf32>,
    %23 = vector.extract_strided_slice %12 {offsets = [160, 0], sizes = [32, 16], strides = [1, 1]} : vector<288x16xf32> to vector<32x16xf32>
    %c0_15 = arith.constant 0 : index
    %c80 = arith.constant 80 : index
    %24 = vector.load %arg5[%c0_15, %c80] : memref<32x576xf32, #tpu.memory_space<vmem>>, vector<32x16xf32>
    tpu.vector_store %arg5[%c0_15, %c80], %23 {strides = array<i32>} : memref<32x576xf32, #tpu.memory_space<vmem>>, vector<32x16xf32>,
    %25 = vector.extract_strided_slice %12 {offsets = [192, 0], sizes = [32, 16], strides = [1, 1]} : vector<288x16xf32> to vector<32x16xf32>
    %c0_16 = arith.constant 0 : index
    %c96 = arith.constant 96 : index
    %26 = vector.load %arg5[%c0_16, %c96] : memref<32x576xf32, #tpu.memory_space<vmem>>, vector<32x16xf32>
    tpu.vector_store %arg5[%c0_16, %c96], %25 {strides = array<i32>} : memref<32x576xf32, #tpu.memory_space<vmem>>, vector<32x16xf32>,
    %27 = vector.extract_strided_slice %12 {offsets = [224, 0], sizes = [32, 16], strides = [1, 1]} : vector<288x16xf32> to vector<32x16xf32>
    %c0_17 = arith.constant 0 : index
    %c112 = arith.constant 112 : index
    %28 = vector.load %arg5[%c0_17, %c112] : memref<32x576xf32, #tpu.memory_space<vmem>>, vector<32x16xf32>
    tpu.vector_store %arg5[%c0_17, %c112], %27 {strides = array<i32>} : memref<32x576xf32, #tpu.memory_space<vmem>>, vector<32x16xf32>,
    %29 = vector.extract_strided_slice %12 {offsets = [256, 0], sizes = [32, 16], strides = [1, 1]} : vector<288x16xf32> to vector<32x16xf32>
    %c0_18 = arith.constant 0 : index
    %c128_19 = arith.constant 128 : index
    %30 = vector.load %arg5[%c0_18, %c128_19] : memref<32x576xf32, #tpu.memory_space<vmem>>, vector<32x16xf32>
    tpu.vector_store %arg5[%c0_18, %c128_19], %29 {strides = array<i32>} : memref<32x576xf32, #tpu.memory_space<vmem>>, vector<32x16xf32>,
    %c0_20 = arith.constant 0 : index
    %c0_21 = arith.constant 0 : index
    %31 = vector.load %arg5[%c0_20, %c0_21] : memref<32x576xf32, #tpu.memory_space<vmem>>, vector<32x144xf32>
    %c32_22 = arith.constant 32 : index
    %c0_23 = arith.constant 0 : index
    %32 = vector.load %arg2[%c32_22, %c0_23] : memref<1040x128xf32, #tpu.memory_space<vmem>>, vector<144x32xf32>
    %cst_24 = arith.constant dense<0.000000e+00> : vector<32x32xf32>
    %33 = tpu.matmul %31, %32, %cst_24 {dimension_numbers = #tpu.dot_dimension_numbers<[1], [0], [0], [1], [0, 0, 1, 1], [], []>} : vector<32x144xf32>, vector<144x32xf32>, vector<32x32xf32> -> vector<32x32xf32>
    %c129 = arith.constant 129 : index
    %c0_25 = arith.constant 0 : index
    %34 = vector.load %arg3[%c129, %c0_25] : memref<144x384xf32, #tpu.memory_space<vmem>>, vector<1x32xf32>
    %35 = vector.broadcast %34 : vector<1x32xf32> to vector<32x32xf32>
    %36 = arith.addf %33, %35 : vector<32x32xf32>
    %cst_26 = arith.constant 0.000000e+00 : f32
    %37 = vector.broadcast %cst_26 : f32 to vector<32x32xf32>
    %38 = arith.cmpf oge, %36, %37 : vector<32x32xf32>
    %cst_27 = arith.constant 2.000000e-01 : f32
    %39 = vector.broadcast %cst_27 : f32 to vector<32x32xf32>
    %40 = arith.mulf %39, %36 : vector<32x32xf32>
    %41 = arith.select %38, %36, %40 : vector<32x32xi1>, vector<32x32xf32>
    %cst_28 = arith.constant dense<0.000000e+00> : vector<32xf32>
    %42 = vector.multi_reduction <add>, %41, %cst_28 [0] : vector<32x32xf32> to vector<32xf32>
    %43 = vector.shape_cast %42 : vector<32xf32> to vector<1x32xf32>
    %cst_29 = arith.constant 3.125000e-02 : f32
    %44 = vector.broadcast %cst_29 : f32 to vector<1x32xf32>
    %45 = arith.mulf %43, %44 : vector<1x32xf32>
    %46 = arith.mulf %41, %41 : vector<32x32xf32>
    %cst_30 = arith.constant dense<0.000000e+00> : vector<32xf32>
    %47 = vector.multi_reduction <add>, %46, %cst_30 [0] : vector<32x32xf32> to vector<32xf32>
    %48 = vector.shape_cast %47 : vector<32xf32> to vector<1x32xf32>
    %cst_31 = arith.constant 3.125000e-02 : f32
    %49 = vector.broadcast %cst_31 : f32 to vector<1x32xf32>
    %50 = arith.mulf %48, %49 : vector<1x32xf32>
    %51 = vector.broadcast %45 : vector<1x32xf32> to vector<32x32xf32>
    %52 = arith.subf %41, %51 : vector<32x32xf32>
    %53 = arith.mulf %45, %45 : vector<1x32xf32>
    %54 = arith.subf %50, %53 : vector<1x32xf32>
    %cst_32 = arith.constant 8.000000e-01 : f32
    %55 = vector.broadcast %cst_32 : f32 to vector<1x32xf32>
    %56 = arith.addf %54, %55 : vector<1x32xf32>
    %57 = math.rsqrt %56 : vector<1x32xf32>
    %58 = vector.broadcast %57 : vector<1x32xf32> to vector<32x32xf32>
    %59 = arith.mulf %52, %58 : vector<32x32xf32>
    %c130 = arith.constant 130 : index
    %c0_33 = arith.constant 0 : index
    %60 = vector.load %arg3[%c130, %c0_33] : memref<144x384xf32, #tpu.memory_space<vmem>>, vector<1x32xf32>
    %61 = vector.broadcast %60 : vector<1x32xf32> to vector<32x32xf32>
    %62 = arith.mulf %59, %61 : vector<32x32xf32>
    %c131 = arith.constant 131 : index
    %c0_34 = arith.constant 0 : index
    %63 = vector.load %arg3[%c131, %c0_34] : memref<144x384xf32, #tpu.memory_space<vmem>>, vector<1x32xf32>
    %64 = vector.broadcast %63 : vector<1x32xf32> to vector<32x32xf32>
    %65 = arith.addf %62, %64 : vector<32x32xf32>
    %c288 = arith.constant 288 : index
    %c0_35 = arith.constant 0 : index
    %66 = vector.load %arg1[%c288, %c0_35] : memref<432x128xf32, #tpu.memory_space<vmem>>, vector<72x32xf32>
    %cst_36 = arith.constant dense<0.000000e+00> : vector<72x32xf32>
    %67 = tpu.matmul %66, %65, %cst_36 {dimension_numbers = #tpu.dot_dimension_numbers<[1], [0], [0], [1], [0, 0, 1, 1], [], []>} : vector<72x32xf32>, vector<32x32xf32>, vector<72x32xf32> -> vector<72x32xf32>
    %68 = vector.extract_strided_slice %67 {offsets = [0, 0], sizes = [8, 32], strides = [1, 1]} : vector<72x32xf32> to vector<8x32xf32>
    %c0_37 = arith.constant 0 : index
    %c0_38 = arith.constant 0 : index
    %69 = vector.load %arg5[%c0_37, %c0_38] : memref<32x576xf32, #tpu.memory_space<vmem>>, vector<8x32xf32>
    tpu.vector_store %arg5[%c0_37, %c0_38], %68 {strides = array<i32>} : memref<32x576xf32, #tpu.memory_space<vmem>>, vector<8x32xf32>,
    %70 = vector.extract_strided_slice %67 {offsets = [8, 0], sizes = [8, 32], strides = [1, 1]} : vector<72x32xf32> to vector<8x32xf32>
    %c0_39 = arith.constant 0 : index
    %c32_40 = arith.constant 32 : index
    %71 = vector.load %arg5[%c0_39, %c32_40] : memref<32x576xf32, #tpu.memory_space<vmem>>, vector<8x32xf32>
    tpu.vector_store %arg5[%c0_39, %c32_40], %70 {strides = array<i32>} : memref<32x576xf32, #tpu.memory_space<vmem>>, vector<8x32xf32>,
    %72 = vector.extract_strided_slice %67 {offsets = [16, 0], sizes = [8, 32], strides = [1, 1]} : vector<72x32xf32> to vector<8x32xf32>
    %c0_41 = arith.constant 0 : index
    %c64_42 = arith.constant 64 : index
    %73 = vector.load %arg5[%c0_41, %c64_42] : memref<32x576xf32, #tpu.memory_space<vmem>>, vector<8x32xf32>
    tpu.vector_store %arg5[%c0_41, %c64_42], %72 {strides = array<i32>} : memref<32x576xf32, #tpu.memory_space<vmem>>, vector<8x32xf32>,
    %74 = vector.extract_strided_slice %67 {offsets = [24, 0], sizes = [8, 32], strides = [1, 1]} : vector<72x32xf32> to vector<8x32xf32>
    %c0_43 = arith.constant 0 : index
    %c96_44 = arith.constant 96 : index
    %75 = vector.load %arg5[%c0_43, %c96_44] : memref<32x576xf32, #tpu.memory_space<vmem>>, vector<8x32xf32>
    tpu.vector_store %arg5[%c0_43, %c96_44], %74 {strides = array<i32>} : memref<32x576xf32, #tpu.memory_space<vmem>>, vector<8x32xf32>,
    %76 = vector.extract_strided_slice %67 {offsets = [32, 0], sizes = [8, 32], strides = [1, 1]} : vector<72x32xf32> to vector<8x32xf32>
    %c0_45 = arith.constant 0 : index
    %c128_46 = arith.constant 128 : index
    %77 = vector.load %arg5[%c0_45, %c128_46] : memref<32x576xf32, #tpu.memory_space<vmem>>, vector<8x32xf32>
    tpu.vector_store %arg5[%c0_45, %c128_46], %76 {strides = array<i32>} : memref<32x576xf32, #tpu.memory_space<vmem>>, vector<8x32xf32>,
    %78 = vector.extract_strided_slice %67 {offsets = [40, 0], sizes = [8, 32], strides = [1, 1]} : vector<72x32xf32> to vector<8x32xf32>
    %c0_47 = arith.constant 0 : index
    %c160 = arith.constant 160 : index
    %79 = vector.load %arg5[%c0_47, %c160] : memref<32x576xf32, #tpu.memory_space<vmem>>, vector<8x32xf32>
    tpu.vector_store %arg5[%c0_47, %c160], %78 {strides = array<i32>} : memref<32x576xf32, #tpu.memory_space<vmem>>, vector<8x32xf32>,
    %80 = vector.extract_strided_slice %67 {offsets = [48, 0], sizes = [8, 32], strides = [1, 1]} : vector<72x32xf32> to vector<8x32xf32>
    %c0_48 = arith.constant 0 : index
    %c192 = arith.constant 192 : index
    %81 = vector.load %arg5[%c0_48, %c192] : memref<32x576xf32, #tpu.memory_space<vmem>>, vector<8x32xf32>
    tpu.vector_store %arg5[%c0_48, %c192], %80 {strides = array<i32>} : memref<32x576xf32, #tpu.memory_space<vmem>>, vector<8x32xf32>,
    %82 = vector.extract_strided_slice %67 {offsets = [56, 0], sizes = [8, 32], strides = [1, 1]} : vector<72x32xf32> to vector<8x32xf32>
    %c0_49 = arith.constant 0 : index
    %c224 = arith.constant 224 : index
    %83 = vector.load %arg5[%c0_49, %c224] : memref<32x576xf32, #tpu.memory_space<vmem>>, vector<8x32xf32>
    tpu.vector_store %arg5[%c0_49, %c224], %82 {strides = array<i32>} : memref<32x576xf32, #tpu.memory_space<vmem>>, vector<8x32xf32>,
    %84 = vector.extract_strided_slice %67 {offsets = [64, 0], sizes = [8, 32], strides = [1, 1]} : vector<72x32xf32> to vector<8x32xf32>
    %c0_50 = arith.constant 0 : index
    %c256 = arith.constant 256 : index
    %85 = vector.load %arg5[%c0_50, %c256] : memref<32x576xf32, #tpu.memory_space<vmem>>, vector<8x32xf32>
    tpu.vector_store %arg5[%c0_50, %c256], %84 {strides = array<i32>} : memref<32x576xf32, #tpu.memory_space<vmem>>, vector<8x32xf32>,
    %c0_51 = arith.constant 0 : index
    %c0_52 = arith.constant 0 : index
    %86 = vector.load %arg5[%c0_51, %c0_52] : memref<32x576xf32, #tpu.memory_space<vmem>>, vector<8x288xf32>
    %c176 = arith.constant 176 : index
    %c0_53 = arith.constant 0 : index
    %87 = vector.load %arg2[%c176, %c0_53] : memref<1040x128xf32, #tpu.memory_space<vmem>>, vector<288x64xf32>
    %cst_54 = arith.constant dense<0.000000e+00> : vector<8x64xf32>
    %88 = tpu.matmul %86, %87, %cst_54 {dimension_numbers = #tpu.dot_dimension_numbers<[1], [0], [0], [1], [0, 0, 1, 1], [], []>} : vector<8x288xf32>, vector<288x64xf32>, vector<8x64xf32> -> vector<8x64xf32>
    %c132 = arith.constant 132 : index
    %c0_55 = arith.constant 0 : index
    %89 = vector.load %arg3[%c132, %c0_55] : memref<144x384xf32, #tpu.memory_space<vmem>>, vector<1x64xf32>
    %90 = vector.broadcast %89 : vector<1x64xf32> to vector<8x64xf32>
    %91 = arith.addf %88, %90 : vector<8x64xf32>
    %cst_56 = arith.constant 0.000000e+00 : f32
    %92 = vector.broadcast %cst_56 : f32 to vector<8x64xf32>
    %93 = arith.cmpf oge, %91, %92 : vector<8x64xf32>
    %cst_57 = arith.constant 2.000000e-01 : f32
    %94 = vector.broadcast %cst_57 : f32 to vector<8x64xf32>
    %95 = arith.mulf %94, %91 : vector<8x64xf32>
    %96 = arith.select %93, %91, %95 : vector<8x64xi1>, vector<8x64xf32>
    %cst_58 = arith.constant dense<0.000000e+00> : vector<64xf32>
    %97 = vector.multi_reduction <add>, %96, %cst_58 [0] : vector<8x64xf32> to vector<64xf32>
    %98 = vector.shape_cast %97 : vector<64xf32> to vector<1x64xf32>
    %cst_59 = arith.constant 1.250000e-01 : f32
    %99 = vector.broadcast %cst_59 : f32 to vector<1x64xf32>
    %100 = arith.mulf %98, %99 : vector<1x64xf32>
    %101 = arith.mulf %96, %96 : vector<8x64xf32>
    %cst_60 = arith.constant dense<0.000000e+00> : vector<64xf32>
    %102 = vector.multi_reduction <add>, %101, %cst_60 [0] : vector<8x64xf32> to vector<64xf32>
    %103 = vector.shape_cast %102 : vector<64xf32> to vector<1x64xf32>
    %cst_61 = arith.constant 1.250000e-01 : f32
    %104 = vector.broadcast %cst_61 : f32 to vector<1x64xf32>
    %105 = arith.mulf %103, %104 : vector<1x64xf32>
    %106 = vector.broadcast %100 : vector<1x64xf32> to vector<8x64xf32>
    %107 = arith.subf %96, %106 : vector<8x64xf32>
    %108 = arith.mulf %100, %100 : vector<1x64xf32>
    %109 = arith.subf %105, %108 : vector<1x64xf32>
    %cst_62 = arith.constant 8.000000e-01 : f32
    %110 = vector.broadcast %cst_62 : f32 to vector<1x64xf32>
    %111 = arith.addf %109, %110 : vector<1x64xf32>
    %112 = math.rsqrt %111 : vector<1x64xf32>
    %113 = vector.broadcast %112 : vector<1x64xf32> to vector<8x64xf32>
    %114 = arith.mulf %107, %113 : vector<8x64xf32>
    %c133 = arith.constant 133 : index
    %c0_63 = arith.constant 0 : index
    %115 = vector.load %arg3[%c133, %c0_63] : memref<144x384xf32, #tpu.memory_space<vmem>>, vector<1x64xf32>
    %116 = vector.broadcast %115 : vector<1x64xf32> to vector<8x64xf32>
    %117 = arith.mulf %114, %116 : vector<8x64xf32>
    %c134 = arith.constant 134 : index
    %c0_64 = arith.constant 0 : index
    %118 = vector.load %arg3[%c134, %c0_64] : memref<144x384xf32, #tpu.memory_space<vmem>>, vector<1x64xf32>
    %119 = vector.broadcast %118 : vector<1x64xf32> to vector<8x64xf32>
    %120 = arith.addf %117, %119 : vector<8x64xf32>
    %c360 = arith.constant 360 : index
    %c0_65 = arith.constant 0 : index
    %121 = vector.load %arg1[%c360, %c0_65] : memref<432x128xf32, #tpu.memory_space<vmem>>, vector<72x8xf32>
    %cst_66 = arith.constant dense<0.000000e+00> : vector<72x64xf32>
    %122 = tpu.matmul %121, %120, %cst_66 {dimension_numbers = #tpu.dot_dimension_numbers<[1], [0], [0], [1], [0, 0, 1, 1], [], []>} : vector<72x8xf32>, vector<8x64xf32>, vector<72x64xf32> -> vector<72x64xf32>
    %123 = vector.extract_strided_slice %122 {offsets = [0, 0], sizes = [2, 64], strides = [1, 1]} : vector<72x64xf32> to vector<2x64xf32>
    %c0_67 = arith.constant 0 : index
    %c0_68 = arith.constant 0 : index
    %124 = vector.load %arg5[%c0_67, %c0_68] : memref<32x576xf32, #tpu.memory_space<vmem>>, vector<2x64xf32>
    tpu.vector_store %arg5[%c0_67, %c0_68], %123 {strides = array<i32>} : memref<32x576xf32, #tpu.memory_space<vmem>>, vector<2x64xf32>,
    %125 = vector.extract_strided_slice %122 {offsets = [8, 0], sizes = [2, 64], strides = [1, 1]} : vector<72x64xf32> to vector<2x64xf32>
    %c0_69 = arith.constant 0 : index
    %c64_70 = arith.constant 64 : index
    %126 = vector.load %arg5[%c0_69, %c64_70] : memref<32x576xf32, #tpu.memory_space<vmem>>, vector<2x64xf32>
    tpu.vector_store %arg5[%c0_69, %c64_70], %125 {strides = array<i32>} : memref<32x576xf32, #tpu.memory_space<vmem>>, vector<2x64xf32>,
    %127 = vector.extract_strided_slice %122 {offsets = [16, 0], sizes = [2, 64], strides = [1, 1]} : vector<72x64xf32> to vector<2x64xf32>
    %c0_71 = arith.constant 0 : index
    %c128_72 = arith.constant 128 : index
    %128 = vector.load %arg5[%c0_71, %c128_72] : memref<32x576xf32, #tpu.memory_space<vmem>>, vector<2x64xf32>
    tpu.vector_store %arg5[%c0_71, %c128_72], %127 {strides = array<i32>} : memref<32x576xf32, #tpu.memory_space<vmem>>, vector<2x64xf32>,
    %129 = vector.extract_strided_slice %122 {offsets = [24, 0], sizes = [2, 64], strides = [1, 1]} : vector<72x64xf32> to vector<2x64xf32>
    %c0_73 = arith.constant 0 : index
    %c192_74 = arith.constant 192 : index
    %130 = vector.load %arg5[%c0_73, %c192_74] : memref<32x576xf32, #tpu.memory_space<vmem>>, vector<2x64xf32>
    tpu.vector_store %arg5[%c0_73, %c192_74], %129 {strides = array<i32>} : memref<32x576xf32, #tpu.memory_space<vmem>>, vector<2x64xf32>,
    %131 = vector.extract_strided_slice %122 {offsets = [32, 0], sizes = [2, 64], strides = [1, 1]} : vector<72x64xf32> to vector<2x64xf32>
    %c0_75 = arith.constant 0 : index
    %c256_76 = arith.constant 256 : index
    %132 = vector.load %arg5[%c0_75, %c256_76] : memref<32x576xf32, #tpu.memory_space<vmem>>, vector<2x64xf32>
    tpu.vector_store %arg5[%c0_75, %c256_76], %131 {strides = array<i32>} : memref<32x576xf32, #tpu.memory_space<vmem>>, vector<2x64xf32>,
    %133 = vector.extract_strided_slice %122 {offsets = [40, 0], sizes = [2, 64], strides = [1, 1]} : vector<72x64xf32> to vector<2x64xf32>
    %c0_77 = arith.constant 0 : index
    %c320 = arith.constant 320 : index
    %134 = vector.load %arg5[%c0_77, %c320] : memref<32x576xf32, #tpu.memory_space<vmem>>, vector<2x64xf32>
    tpu.vector_store %arg5[%c0_77, %c320], %133 {strides = array<i32>} : memref<32x576xf32, #tpu.memory_space<vmem>>, vector<2x64xf32>,
    %135 = vector.extract_strided_slice %122 {offsets = [48, 0], sizes = [2, 64], strides = [1, 1]} : vector<72x64xf32> to vector<2x64xf32>
    %c0_78 = arith.constant 0 : index
    %c384 = arith.constant 384 : index
    %136 = vector.load %arg5[%c0_78, %c384] : memref<32x576xf32, #tpu.memory_space<vmem>>, vector<2x64xf32>
    tpu.vector_store %arg5[%c0_78, %c384], %135 {strides = array<i32>} : memref<32x576xf32, #tpu.memory_space<vmem>>, vector<2x64xf32>,
    %137 = vector.extract_strided_slice %122 {offsets = [56, 0], sizes = [2, 64], strides = [1, 1]} : vector<72x64xf32> to vector<2x64xf32>
    %c0_79 = arith.constant 0 : index
    %c448 = arith.constant 448 : index
    %138 = vector.load %arg5[%c0_79, %c448] : memref<32x576xf32, #tpu.memory_space<vmem>>, vector<2x64xf32>
    tpu.vector_store %arg5[%c0_79, %c448], %137 {strides = array<i32>} : memref<32x576xf32, #tpu.memory_space<vmem>>, vector<2x64xf32>,
    %139 = vector.extract_strided_slice %122 {offsets = [64, 0], sizes = [2, 64], strides = [1, 1]} : vector<72x64xf32> to vector<2x64xf32>
    %c0_80 = arith.constant 0 : index
    %c512 = arith.constant 512 : index
    %140 = vector.load %arg5[%c0_80, %c512] : memref<32x576xf32, #tpu.memory_space<vmem>>, vector<2x64xf32>
    tpu.vector_store %arg5[%c0_80, %c512], %139 {strides = array<i32>} : memref<32x576xf32, #tpu.memory_space<vmem>>, vector<2x64xf32>,
    %c0_81 = arith.constant 0 : index
    %c0_82 = arith.constant 0 : index
    %141 = vector.load %arg5[%c0_81, %c0_82] : memref<32x576xf32, #tpu.memory_space<vmem>>, vector<2x576xf32>
    %c464 = arith.constant 464 : index
    %c0_83 = arith.constant 0 : index
    %142 = vector.load %arg2[%c464, %c0_83] : memref<1040x128xf32, #tpu.memory_space<vmem>>, vector<576x128xf32>
    %cst_84 = arith.constant dense<0.000000e+00> : vector<2x128xf32>
    %143 = tpu.matmul %141, %142, %cst_84 {dimension_numbers = #tpu.dot_dimension_numbers<[1], [0], [0], [1], [0, 0, 1, 1], [], []>} : vector<2x576xf32>, vector<576x128xf32>, vector<2x128xf32> -> vector<2x128xf32>
    %c135 = arith.constant 135 : index
    %c0_85 = arith.constant 0 : index
    %144 = vector.load %arg3[%c135, %c0_85] : memref<144x384xf32, #tpu.memory_space<vmem>>, vector<1x128xf32>
    %145 = vector.broadcast %144 : vector<1x128xf32> to vector<2x128xf32>
    %146 = arith.addf %143, %145 : vector<2x128xf32>
    %cst_86 = arith.constant 0.000000e+00 : f32
    %147 = vector.broadcast %cst_86 : f32 to vector<2x128xf32>
    %148 = arith.cmpf oge, %146, %147 : vector<2x128xf32>
    %cst_87 = arith.constant 2.000000e-01 : f32
    %149 = vector.broadcast %cst_87 : f32 to vector<2x128xf32>
    %150 = arith.mulf %149, %146 : vector<2x128xf32>
    %151 = arith.select %148, %146, %150 : vector<2x128xi1>, vector<2x128xf32>
    %cst_88 = arith.constant dense<0.000000e+00> : vector<128xf32>
    %152 = vector.multi_reduction <add>, %151, %cst_88 [0] : vector<2x128xf32> to vector<128xf32>
    %153 = vector.shape_cast %152 : vector<128xf32> to vector<1x128xf32>
    %cst_89 = arith.constant 5.000000e-01 : f32
    %154 = vector.broadcast %cst_89 : f32 to vector<1x128xf32>
    %155 = arith.mulf %153, %154 : vector<1x128xf32>
    %156 = arith.mulf %151, %151 : vector<2x128xf32>
    %cst_90 = arith.constant dense<0.000000e+00> : vector<128xf32>
    %157 = vector.multi_reduction <add>, %156, %cst_90 [0] : vector<2x128xf32> to vector<128xf32>
    %158 = vector.shape_cast %157 : vector<128xf32> to vector<1x128xf32>
    %cst_91 = arith.constant 5.000000e-01 : f32
    %159 = vector.broadcast %cst_91 : f32 to vector<1x128xf32>
    %160 = arith.mulf %158, %159 : vector<1x128xf32>
    %161 = vector.broadcast %155 : vector<1x128xf32> to vector<2x128xf32>
    %162 = arith.subf %151, %161 : vector<2x128xf32>
    %163 = arith.mulf %155, %155 : vector<1x128xf32>
    %164 = arith.subf %160, %163 : vector<1x128xf32>
    %cst_92 = arith.constant 8.000000e-01 : f32
    %165 = vector.broadcast %cst_92 : f32 to vector<1x128xf32>
    %166 = arith.addf %164, %165 : vector<1x128xf32>
    %167 = math.rsqrt %166 : vector<1x128xf32>
    %168 = vector.broadcast %167 : vector<1x128xf32> to vector<2x128xf32>
    %169 = arith.mulf %162, %168 : vector<2x128xf32>
    %c136 = arith.constant 136 : index
    %c0_93 = arith.constant 0 : index
    %170 = vector.load %arg3[%c136, %c0_93] : memref<144x384xf32, #tpu.memory_space<vmem>>, vector<1x128xf32>
    %171 = vector.broadcast %170 : vector<1x128xf32> to vector<2x128xf32>
    %172 = arith.mulf %169, %171 : vector<2x128xf32>
    %c137 = arith.constant 137 : index
    %c0_94 = arith.constant 0 : index
    %173 = vector.load %arg3[%c137, %c0_94] : memref<144x384xf32, #tpu.memory_space<vmem>>, vector<1x128xf32>
    %174 = vector.broadcast %173 : vector<1x128xf32> to vector<2x128xf32>
    %175 = arith.addf %172, %174 : vector<2x128xf32>
    %c0_95 = arith.constant 0 : index
    %c0_96 = arith.constant 0 : index
    %176 = vector.load %arg3[%c0_95, %c0_96] : memref<144x384xf32, #tpu.memory_space<vmem>>, vector<128x384xf32>
    %cst_97 = arith.constant dense<0.000000e+00> : vector<2x384xf32>
    %177 = tpu.matmul %175, %176, %cst_97 {dimension_numbers = #tpu.dot_dimension_numbers<[1], [0], [0], [1], [0, 0, 1, 1], [], []>} : vector<2x128xf32>, vector<128x384xf32>, vector<2x384xf32> -> vector<2x384xf32>
    %c138 = arith.constant 138 : index
    %c0_98 = arith.constant 0 : index
    %178 = vector.load %arg3[%c138, %c0_98] : memref<144x384xf32, #tpu.memory_space<vmem>>, vector<1x384xf32>
    %179 = vector.broadcast %178 : vector<1x384xf32> to vector<2x384xf32>
    %180 = arith.addf %177, %179 : vector<2x384xf32>
    %c0_99 = arith.constant 0 : index
    %c0_100 = arith.constant 0 : index
    %181 = vector.load %arg4[%c0_99, %c0_100] : memref<2x384xf32, #tpu.memory_space<vmem>>, vector<2x384xf32>
    tpu.vector_store %arg4[%c0_99, %c0_100], %180 {strides = array<i32>} : memref<2x384xf32, #tpu.memory_space<vmem>>, vector<2x384xf32>,
    return
  }
}

</mosaic_0001>

<llo_original>
// kernel: featurizer_forward.1
$region0: #{featurizer_forward.1}
  #allocation0 [shape = 'u32[]', space=smem, size = 0x4, offset = 0x4, fixed_abs, tag = 'smem constant byte address 0x4 - core index']
  #allocation1 [shape = 'u32[72,128]{1,0:T(1,128)}', space=vmem, size = 0x9000, scoped, tag = 'internal scratch']
  #allocation2 [shape = 'f32[32,576]{1,0:T(8,128)}', space=vmem, size = 0x14000, scoped, tag = 'scratch operand']
  %s0 = inlined_call_operand.vmem [shape: f32[128,32], index: 0, kind: input, shape index: {}]
  %s1 = inlined_call_operand.vmem [shape: f32[432,128], index: 1, kind: input, shape index: {}]
  %s2 = inlined_call_operand.vmem [shape: f32[1040,128], index: 2, kind: input, shape index: {}]
  %s3 = inlined_call_operand.vmem [shape: f32[144,384], index: 3, kind: input, shape index: {}]
  %s4 = inlined_call_operand.hbm [shape: f32[2,384], index: 4, kind: output, shape index: {}]
  %s5 = sld [smem:[#allocation0]]
  $region26: #{featurizer_forward.1} parent=0
    _
  %s7 = ssub.s32 1, %s5
  %s8 = scalar_select 0, %s7, %s5
  $region1: #{featurizer_forward.1} parent=0
    #allocation3 [shape = 'u8[3072]{0}', space=vmem, size = 0xc00, scoped, tag = 'output window, operand 0, single buffered']
    #allocation4 [shape = 's32[1]{0}', space=sflag, size = 0x4, scoped, tag = 'scoped memory for featurizer_forward.1']
    %9 = vsyncpa [#allocation4], 0
    // Predicated region
    $region2: #{featurizer_forward.1} parent=1 // pred_check
      _
    $region3: #{featurizer_forward.1} parent=1 // pred_check_branch
      %11 = sbr.rel (0) target = $region5
    $region4: #{featurizer_forward.1} parent=1 // pred_region
      _
    $region5: #{featurizer_forward.1} parent=1 // pred_fallthru
      _
    // Predicated region
    $region6: #{featurizer_forward.1} parent=1 // pred_check
      _
    $region7: #{featurizer_forward.1} parent=1 // pred_check_branch
      %13 = sbr.rel (0) target = $region9
    $region8: #{featurizer_forward.1} parent=1 // pred_region
      _
    $region9: #{featurizer_forward.1} parent=1 // pred_fallthru
      _
    // Predicated region
    $region10: #{featurizer_forward.1} parent=1 // pred_check
      _
    $region11: #{featurizer_forward.1} parent=1 // pred_check_branch
      %15 = sbr.rel (0) target = $region13
    $region12: #{featurizer_forward.1} parent=1 // pred_region
      _
    $region13: #{featurizer_forward.1} parent=1 // pred_fallthru
      _
    // Predicated region
    $region14: #{featurizer_forward.1} parent=1 // pred_check
      _
    $region15: #{featurizer_forward.1} parent=1 // pred_check_branch
      %17 = sbr.rel (0) target = $region17
    $region16: #{featurizer_forward.1} parent=1 // pred_region
      _
    $region17: #{featurizer_forward.1} parent=1 // pred_fallthru
      _
    %v18 = vld [vmem:[%s2] sm:$0xff]
    %v19 = vld [vmem:[%s2 + $0x8] sm:$0xff]
    %v20 = vld [vmem:[%s2 + $0x10] sm:$0xff]
    %v21 = vld [vmem:[%s2 + $0x18] sm:$0xff]
    %v22 = vld [vmem:[%s0] sm:$0xff]
    %v23 = vld [vmem:[%s0 + $0x8] sm:$0xff]
    %v24 = vld [vmem:[%s0 + $0x10] sm:$0xff]
    %v25 = vld [vmem:[%s0 + $0x18] sm:$0xff]
    %v26 = vld [vmem:[%s0 + $0x20] sm:$0xff]
    %v27 = vld [vmem:[%s0 + $0x28] sm:$0xff]
    %v28 = vld [vmem:[%s0 + $0x30] sm:$0xff]
    %v29 = vld [vmem:[%s0 + $0x38] sm:$0xff]
    %v30 = vld [vmem:[%s0 + $0x40] sm:$0xff]
    %v31 = vld [vmem:[%s0 + $0x48] sm:$0xff]
    %v32 = vld [vmem:[%s0 + $0x50] sm:$0xff]
    %v33 = vld [vmem:[%s0 + $0x58] sm:$0xff]
    %v34 = vld [vmem:[%s0 + $0x60] sm:$0xff]
    %v35 = vld [vmem:[%s0 + $0x68] sm:$0xff]
    %v36 = vld [vmem:[%s0 + $0x70] sm:$0xff]
    %v37 = vld [vmem:[%s0 + $0x78] sm:$0xff]
    %v38 = vld [vmem:[%s3 + $0x180] ss:$0 sm:$0xff]
    %vm39 = vcmask 261120
    %v41 = vsel %vm39, %v22, 0
    %v44 = vsel %vm39, %v23, 0
    %v47 = vsel %vm39, %v24, 0
    %v50 = vsel %vm39, %v25, 0
    %v53 = vsel %vm39, %v26, 0
    %v56 = vsel %vm39, %v27, 0
    %v59 = vsel %vm39, %v28, 0
    %v62 = vsel %vm39, %v29, 0
    %v65 = vsel %vm39, %v30, 0
    %v68 = vsel %vm39, %v31, 0
    %v71 = vsel %vm39, %v32, 0
    %v74 = vsel %vm39, %v33, 0
    %v77 = vsel %vm39, %v34, 0
    %v80 = vsel %vm39, %v35, 0
    %v83 = vsel %vm39, %v36, 0
    %v86 = vsel %vm39, %v37, 0
    %88 = vmatpush.msra.mxu0 0.0
    %89 = vmatpush.msra.mxu0 0.0
    %90 = vmatpush.msra.mxu0 0.0
    %91 = vmatpush.msra.mxu0 0.0
    %92 = vmatpush.msra.mxu0 0.0
    %93 = vmatpush.msra.mxu0 0.0
    %94 = vmatpush.msra.mxu0 0.0
    %95 = vmatpush.msra.mxu0 0.0
    %96 = vmatpush.msra.mxu0 0.0
    %97 = vmatpush.msra.mxu0 0.0
    %98 = vmatpush.msra.mxu0 0.0
    %99 = vmatpush.msra.mxu0 0.0
    %100 = vmatpush.msra.mxu0 %v21
    %101 = vmatpush.msra.mxu0 %v20
    %102 = vmatpush.msra.mxu0 %v19
    %103 = vmatpush.msra.mxu0 %v18
    %104 = vmatmul.f32.gmra.mxu0 %v41
    %v105 = vpop.f32.mrf.mxu0
    %v106 = vadd.f32 %v38, %v105
    %107 = vmatmul.f32.gmra.mxu0 %v44
    %v108 = vpop.f32.mrf.mxu0
    %v109 = vadd.f32 %v38, %v108
    %110 = vmatmul.f32.gmra.mxu0 %v47
    %v111 = vpop.f32.mrf.mxu0
    %v112 = vadd.f32 %v38, %v111
    %113 = vmatmul.f32.gmra.mxu0 %v50
    %v114 = vpop.f32.mrf.mxu0
    %v115 = vadd.f32 %v38, %v114
    %116 = vmatmul.f32.gmra.mxu0 %v53
    %v117 = vpop.f32.mrf.mxu0
    %v118 = vadd.f32 %v38, %v117
    %119 = vmatmul.f32.gmra.mxu0 %v56
    %v120 = vpop.f32.mrf.mxu0
    %v121 = vadd.f32 %v38, %v120
    %122 = vmatmul.f32.gmra.mxu0 %v59
    %v123 = vpop.f32.mrf.mxu0
    %v124 = vadd.f32 %v38, %v123
    %125 = vmatmul.f32.gmra.mxu0 %v62
    %v126 = vpop.f32.mrf.mxu0
    %v127 = vadd.f32 %v38, %v126
    %128 = vmatmul.f32.gmra.mxu0 %v65
    %v129 = vpop.f32.mrf.mxu0
    %v130 = vadd.f32 %v38, %v129
    %131 = vmatmul.f32.gmra.mxu0 %v68
    %v132 = vpop.f32.mrf.mxu0
    %v133 = vadd.f32 %v38, %v132
    %134 = vmatmul.f32.gmra.mxu0 %v71
    %v135 = vpop.f32.mrf.mxu0
    %v136 = vadd.f32 %v38, %v135
    %137 = vmatmul.f32.gmra.mxu0 %v74
    %v138 = vpop.f32.mrf.mxu0
    %v139 = vadd.f32 %v38, %v138
    %140 = vmatmul.f32.gmra.mxu0 %v77
    %v141 = vpop.f32.mrf.mxu0
    %v142 = vadd.f32 %v38, %v141
    %143 = vmatmul.f32.gmra.mxu0 %v80
    %v144 = vpop.f32.mrf.mxu0
    %v145 = vadd.f32 %v38, %v144
    %146 = vmatmul.f32.gmra.mxu0 %v83
    %v147 = vpop.f32.mrf.mxu0
    %v148 = vadd.f32 %v38, %v147
    %149 = vmatmul.f32.gmra.mxu0 %v86
    %v150 = vpop.f32.mrf.mxu0
    %v151 = vadd.f32 %v38, %v150
    %152 = vdwg.mxu0
    %vm153 = vcmp.ge.f32.partialorder %v106, 0.0
    %vm154 = vcmp.ge.f32.partialorder %v109, 0.0
    %vm155 = vcmp.ge.f32.partialorder %v112, 0.0
    %vm156 = vcmp.ge.f32.partialorder %v115, 0.0
    %vm157 = vcmp.ge.f32.partialorder %v118, 0.0
    %vm158 = vcmp.ge.f32.partialorder %v121, 0.0
    %vm159 = vcmp.ge.f32.partialorder %v124, 0.0
    %vm160 = vcmp.ge.f32.partialorder %v127, 0.0
    %vm161 = vcmp.ge.f32.partialorder %v130, 0.0
    %vm162 = vcmp.ge.f32.partialorder %v133, 0.0
    %vm163 = vcmp.ge.f32.partialorder %v136, 0.0
    %vm164 = vcmp.ge.f32.partialorder %v139, 0.0
    %vm165 = vcmp.ge.f32.partialorder %v142, 0.0
    %vm166 = vcmp.ge.f32.partialorder %v145, 0.0
    %vm167 = vcmp.ge.f32.partialorder %v148, 0.0
    %vm168 = vcmp.ge.f32.partialorder %v151, 0.0
    %v169 = vmul.f32 %v106, 0.2
    %v170 = vmul.f32 %v109, 0.2
    %v171 = vmul.f32 %v112, 0.2
    %v172 = vmul.f32 %v115, 0.2
    %v173 = vmul.f32 %v118, 0.2
    %v174 = vmul.f32 %v121, 0.2
    %v175 = vmul.f32 %v124, 0.2
    %v176 = vmul.f32 %v127, 0.2
    %v177 = vmul.f32 %v130, 0.2
    %v178 = vmul.f32 %v133, 0.2
    %v179 = vmul.f32 %v136, 0.2
    %v180 = vmul.f32 %v139, 0.2
    %v181 = vmul.f32 %v142, 0.2
    %v182 = vmul.f32 %v145, 0.2
    %v183 = vmul.f32 %v148, 0.2
    %v184 = vmul.f32 %v151, 0.2
    %v185 = vsel %vm153, %v106, %v169
    %v186 = vsel %vm154, %v109, %v170
    %v187 = vsel %vm155, %v112, %v171
    %v188 = vsel %vm156, %v115, %v172
    %v189 = vsel %vm157, %v118, %v173
    %v190 = vsel %vm158, %v121, %v174
    %v191 = vsel %vm159, %v124, %v175
    %v192 = vsel %vm160, %v127, %v176
    %v193 = vsel %vm161, %v130, %v177
    %v194 = vsel %vm162, %v133, %v178
    %v195 = vsel %vm163, %v136, %v179
    %v196 = vsel %vm164, %v139, %v180
    %v197 = vsel %vm165, %v142, %v181
    %v198 = vsel %vm166, %v145, %v182
    %v199 = vsel %vm167, %v148, %v183
    %v200 = vsel %vm168, %v151, %v184
    %v201 = vld [vmem:[%s1] sm:$0xff]
    %v202 = vld [vmem:[%s1 + $0x8] sm:$0xff]
    %v203 = vld [vmem:[%s1 + $0x10] sm:$0xff]
    %v204 = vld [vmem:[%s1 + $0x18] sm:$0xff]
    %v205 = vld [vmem:[%s1 + $0x20] sm:$0xff]
    %v206 = vld [vmem:[%s1 + $0x28] sm:$0xff]
    %v207 = vld [vmem:[%s1 + $0x30] sm:$0xff]
    %v208 = vld [vmem:[%s1 + $0x38] sm:$0xff]
    %v209 = vld [vmem:[%s1 + $0x40] sm:$0xff]
    %v210 = vld [vmem:[%s1 + $0x48] sm:$0xff]
    %v211 = vld [vmem:[%s1 + $0x50] sm:$0xff]
    %v212 = vld [vmem:[%s1 + $0x58] sm:$0xff]
    %v213 = vld [vmem:[%s1 + $0x60] sm:$0xff]
    %v214 = vld [vmem:[%s1 + $0x68] sm:$0xff]
    %v215 = vld [vmem:[%s1 + $0x70] sm:$0xff]
    %v216 = vld [vmem:[%s1 + $0x78] sm:$0xff]
    %v217 = vld [vmem:[%s1 + $0x80] sm:$0xff]
    %v218 = vld [vmem:[%s1 + $0x88] sm:$0xff]
    %v219 = vld [vmem:[%s1 + $0x90] sm:$0xff]
    %v220 = vld [vmem:[%s1 + $0x98] sm:$0xff]
    %v221 = vld [vmem:[%s1 + $0xa0] sm:$0xff]
    %v222 = vld [vmem:[%s1 + $0xa8] sm:$0xff]
    %v223 = vld [vmem:[%s1 + $0xb0] sm:$0xff]
    %v224 = vld [vmem:[%s1 + $0xb8] sm:$0xff]
    %v225 = vld [vmem:[%s1 + $0xc0] sm:$0xff]
    %v226 = vld [vmem:[%s1 + $0xc8] sm:$0xff]
    %v227 = vld [vmem:[%s1 + $0xd0] sm:$0xff]
    %v228 = vld [vmem:[%s1 + $0xd8] sm:$0xff]
    %v229 = vld [vmem:[%s1 + $0xe0] sm:$0xff]
    %v230 = vld [vmem:[%s1 + $0xe8] sm:$0xff]
    %v231 = vld [vmem:[%s1 + $0xf0] sm:$0xff]
    %v232 = vld [vmem:[%s1 + $0xf8] sm:$0xff]
    %v233 = vld [vmem:[%s1 + $0x100] sm:$0xff]
    %v234 = vld [vmem:[%s1 + $0x108] sm:$0xff]
    %v235 = vld [vmem:[%s1 + $0x110] sm:$0xff]
    %v236 = vld [vmem:[%s1 + $0x118] sm:$0xff]
    %237 = vmatpush.msra.mxu0 %v200
    %238 = vmatpush.msra.mxu0 %v199
    %239 = vmatpush.msra.mxu0 %v198
    %240 = vmatpush.msra.mxu0 %v197
    %241 = vmatpush.msra.mxu0 %v196
    %242 = vmatpush.msra.mxu0 %v195
    %243 = vmatpush.msra.mxu0 %v194
    %244 = vmatpush.msra.mxu0 %v193
    %245 = vmatpush.msra.mxu0 %v192
    %246 = vmatpush.msra.mxu0 %v191
    %247 = vmatpush.msra.mxu0 %v190
    %248 = vmatpush.msra.mxu0 %v189
    %249 = vmatpush.msra.mxu0 %v188
    %250 = vmatpush.msra.mxu0 %v187
    %251 = vmatpush.msra.mxu0 %v186
    %252 = vmatpush.msra.mxu0 %v185
    %253 = vmatmul.f32.gmra.mxu0 %v201
    %v254 = vpop.f32.mrf.mxu0
    %v255 = vadd.f32 0.0, %v254
    %256 = vmatmul.f32.gmra.mxu0 %v202
    %v257 = vpop.f32.mrf.mxu0
    %v258 = vadd.f32 0.0, %v257
    %259 = vmatmul.f32.gmra.mxu0 %v203
    %v260 = vpop.f32.mrf.mxu0
    %v261 = vadd.f32 0.0, %v260
    %262 = vmatmul.f32.gmra.mxu0 %v204
    %v263 = vpop.f32.mrf.mxu0
    %v264 = vadd.f32 0.0, %v263
    %265 = vmatmul.f32.gmra.mxu0 %v205
    %v266 = vpop.f32.mrf.mxu0
    %v267 = vadd.f32 0.0, %v266
    %268 = vmatmul.f32.gmra.mxu0 %v206
    %v269 = vpop.f32.mrf.mxu0
    %v270 = vadd.f32 0.0, %v269
    %271 = vmatmul.f32.gmra.mxu0 %v207
    %v272 = vpop.f32.mrf.mxu0
    %v273 = vadd.f32 0.0, %v272
    %274 = vmatmul.f32.gmra.mxu0 %v208
    %v275 = vpop.f32.mrf.mxu0
    %v276 = vadd.f32 0.0, %v275
    %277 = vmatmul.f32.gmra.mxu0 %v209
    %v278 = vpop.f32.mrf.mxu0
    %v279 = vadd.f32 0.0, %v278
    %280 = vmatmul.f32.gmra.mxu0 %v210
    %v281 = vpop.f32.mrf.mxu0
    %v282 = vadd.f32 0.0, %v281
    %283 = vmatmul.f32.gmra.mxu0 %v211
    %v284 = vpop.f32.mrf.mxu0
    %v285 = vadd.f32 0.0, %v284
    %286 = vmatmul.f32.gmra.mxu0 %v212
    %v287 = vpop.f32.mrf.mxu0
    %v288 = vadd.f32 0.0, %v287
    %289 = vmatmul.f32.gmra.mxu0 %v213
    %v290 = vpop.f32.mrf.mxu0
    %v291 = vadd.f32 0.0, %v290
    %292 = vmatmul.f32.gmra.mxu0 %v214
    %v293 = vpop.f32.mrf.mxu0
    %v294 = vadd.f32 0.0, %v293
    %295 = vmatmul.f32.gmra.mxu0 %v215
    %v296 = vpop.f32.mrf.mxu0
    %v297 = vadd.f32 0.0, %v296
    %298 = vmatmul.f32.gmra.mxu0 %v216
    %v299 = vpop.f32.mrf.mxu0
    %v300 = vadd.f32 0.0, %v299
    %301 = vmatmul.f32.gmra.mxu0 %v217
    %v302 = vpop.f32.mrf.mxu0
    %v303 = vadd.f32 0.0, %v302
    %304 = vmatmul.f32.gmra.mxu0 %v218
    %v305 = vpop.f32.mrf.mxu0
    %v306 = vadd.f32 0.0, %v305
    %307 = vmatmul.f32.gmra.mxu0 %v219
    %v308 = vpop.f32.mrf.mxu0
    %v309 = vadd.f32 0.0, %v308
    %310 = vmatmul.f32.gmra.mxu0 %v220
    %v311 = vpop.f32.mrf.mxu0
    %v312 = vadd.f32 0.0, %v311
    %313 = vmatmul.f32.gmra.mxu0 %v221
    %v314 = vpop.f32.mrf.mxu0
    %v315 = vadd.f32 0.0, %v314
    %316 = vmatmul.f32.gmra.mxu0 %v222
    %v317 = vpop.f32.mrf.mxu0
    %v318 = vadd.f32 0.0, %v317
    %319 = vmatmul.f32.gmra.mxu0 %v223
    %v320 = vpop.f32.mrf.mxu0
    %v321 = vadd.f32 0.0, %v320
    %322 = vmatmul.f32.gmra.mxu0 %v224
    %v323 = vpop.f32.mrf.mxu0
    %v324 = vadd.f32 0.0, %v323
    %325 = vmatmul.f32.gmra.mxu0 %v225
    %v326 = vpop.f32.mrf.mxu0
    %v327 = vadd.f32 0.0, %v326
    %328 = vmatmul.f32.gmra.mxu0 %v226
    %v329 = vpop.f32.mrf.mxu0
    %v330 = vadd.f32 0.0, %v329
    %331 = vmatmul.f32.gmra.mxu0 %v227
    %v332 = vpop.f32.mrf.mxu0
    %v333 = vadd.f32 0.0, %v332
    %334 = vmatmul.f32.gmra.mxu0 %v228
    %v335 = vpop.f32.mrf.mxu0
    %v336 = vadd.f32 0.0, %v335
    %337 = vmatmul.f32.gmra.mxu0 %v229
    %v338 = vpop.f32.mrf.mxu0
    %v339 = vadd.f32 0.0, %v338
    %340 = vmatmul.f32.gmra.mxu0 %v230
    %v341 = vpop.f32.mrf.mxu0
    %v342 = vadd.f32 0.0, %v341
    %343 = vmatmul.f32.gmra.mxu0 %v231
    %v344 = vpop.f32.mrf.mxu0
    %v345 = vadd.f32 0.0, %v344
    %346 = vmatmul.f32.gmra.mxu0 %v232
    %v347 = vpop.f32.mrf.mxu0
    %v348 = vadd.f32 0.0, %v347
    %349 = vmatmul.f32.gmra.mxu0 %v233
    %v350 = vpop.f32.mrf.mxu0
    %v351 = vadd.f32 0.0, %v350
    %352 = vmatmul.f32.gmra.mxu0 %v234
    %v353 = vpop.f32.mrf.mxu0
    %v354 = vadd.f32 0.0, %v353
    %355 = vmatmul.f32.gmra.mxu0 %v235
    %v356 = vpop.f32.mrf.mxu0
    %v357 = vadd.f32 0.0, %v356
    %358 = vmatmul.f32.gmra.mxu0 %v236
    %v359 = vpop.f32.mrf.mxu0
    %v360 = vadd.f32 0.0, %v359
    %361 = vdwg.mxu0
    %vm362 = vcmask 130048
    %363 = vst.msk [vmem:[#allocation2] sm:$0xff] %vm362, %v255
    %364 = vst.msk [vmem:[#allocation2 + $0x28] sm:$0xff] %vm362, %v258
    %365 = vst.msk [vmem:[#allocation2 + $0x50] sm:$0xff] %vm362, %v261
    %366 = vst.msk [vmem:[#allocation2 + $0x78] sm:$0xff] %vm362, %v264
    %371 = vrot.lane.b32.xlu0 %v267, 16
    %v372 = vpop.permute.xlu0 %371
    %373 = vrot.lane.b32.xlu0 %v270, 16
    %v374 = vpop.permute.xlu0 %373
    %375 = vrot.lane.b32.xlu0 %v273, 16
    %v376 = vpop.permute.xlu0 %375
    %377 = vrot.lane.b32.xlu0 %v276, 16
    %v378 = vpop.permute.xlu0 %377
    %vm383 = vcmask 261248
    %384 = vst.msk [vmem:[#allocation2] sm:$0xff] %vm383, %v372
    %385 = vst.msk [vmem:[#allocation2 + $0x28] sm:$0xff] %vm383, %v374
    %386 = vst.msk [vmem:[#allocation2 + $0x50] sm:$0xff] %vm383, %v376
    %387 = vst.msk [vmem:[#allocation2 + $0x78] sm:$0xff] %vm383, %v378
    %392 = vrot.lane.b32.xlu0 %v279, 32
    %v393 = vpop.permute.xlu0 %392
    %394 = vrot.lane.b32.xlu0 %v282, 32
    %v395 = vpop.permute.xlu0 %394
    %396 = vrot.lane.b32.xlu0 %v285, 32
    %v397 = vpop.permute.xlu0 %396
    %398 = vrot.lane.b32.xlu0 %v288, 32
    %v399 = vpop.permute.xlu0 %398
    %vm404 = vcmask 392448
    %405 = vst.msk [vmem:[#allocation2] sm:$0xff] %vm404, %v393
    %406 = vst.msk [vmem:[#allocation2 + $0x28] sm:$0xff] %vm404, %v395
    %407 = vst.msk [vmem:[#allocation2 + $0x50] sm:$0xff] %vm404, %v397
    %408 = vst.msk [vmem:[#allocation2 + $0x78] sm:$0xff] %vm404, %v399
    %413 = vrot.lane.b32.xlu0 %v291, 48
    %v414 = vpop.permute.xlu0 %413
    %415 = vrot.lane.b32.xlu0 %v294, 48
    %v416 = vpop.permute.xlu0 %415
    %417 = vrot.lane.b32.xlu0 %v297, 48
    %v418 = vpop.permute.xlu0 %417
    %419 = vrot.lane.b32.xlu0 %v300, 48
    %v420 = vpop.permute.xlu0 %419
    %vm425 = vcmask 523648
    %426 = vst.msk [vmem:[#allocation2] sm:$0xff] %vm425, %v414
    %427 = vst.msk [vmem:[#allocation2 + $0x28] sm:$0xff] %vm425, %v416
    %428 = vst.msk [vmem:[#allocation2 + $0x50] sm:$0xff] %vm425, %v418
    %429 = vst.msk [vmem:[#allocation2 + $0x78] sm:$0xff] %vm425, %v420
    %434 = vrot.lane.b32.xlu0 %v303, 64
    %v435 = vpop.permute.xlu0 %434
    %436 = vrot.lane.b32.xlu0 %v306, 64
    %v437 = vpop.permute.xlu0 %436
    %438 = vrot.lane.b32.xlu0 %v309, 64
    %v439 = vpop.permute.xlu0 %438
    %440 = vrot.lane.b32.xlu0 %v312, 64
    %v441 = vpop.permute.xlu0 %440
    %vm446 = vcmask 654848
    %447 = vst.msk [vmem:[#allocation2] sm:$0xff] %vm446, %v435
    %448 = vst.msk [vmem:[#allocation2 + $0x28] sm:$0xff] %vm446, %v437
    %449 = vst.msk [vmem:[#allocation2 + $0x50] sm:$0xff] %vm446, %v439
    %450 = vst.msk [vmem:[#allocation2 + $0x78] sm:$0xff] %vm446, %v441
    %455 = vrot.lane.b32.xlu0 %v315, 80
    %v456 = vpop.permute.xlu0 %455
    %457 = vrot.lane.b32.xlu0 %v318, 80
    %v458 = vpop.permute.xlu0 %457
    %459 = vrot.lane.b32.xlu0 %v321, 80
    %v460 = vpop.permute.xlu0 %459
    %461 = vrot.lane.b32.xlu0 %v324, 80
    %v462 = vpop.permute.xlu0 %461
    %vm467 = vcmask 786048
    %468 = vst.msk [vmem:[#allocation2] sm:$0xff] %vm467, %v456
    %469 = vst.msk [vmem:[#allocation2 + $0x28] sm:$0xff] %vm467, %v458
    %470 = vst.msk [vmem:[#allocation2 + $0x50] sm:$0xff] %vm467, %v460
    %471 = vst.msk [vmem:[#allocation2 + $0x78] sm:$0xff] %vm467, %v462
    %476 = vrot.lane.b32.xlu0 %v327, 96
    %v477 = vpop.permute.xlu0 %476
    %478 = vrot.lane.b32.xlu0 %v330, 96
    %v479 = vpop.permute.xlu0 %478
    %480 = vrot.lane.b32.xlu0 %v333, 96
    %v481 = vpop.permute.xlu0 %480
    %482 = vrot.lane.b32.xlu0 %v336, 96
    %v483 = vpop.permute.xlu0 %482
    %vm488 = vcmask 917248
    %489 = vst.msk [vmem:[#allocation2] sm:$0xff] %vm488, %v477
    %490 = vst.msk [vmem:[#allocation2 + $0x28] sm:$0xff] %vm488, %v479
    %491 = vst.msk [vmem:[#allocation2 + $0x50] sm:$0xff] %vm488, %v481
    %492 = vst.msk [vmem:[#allocation2 + $0x78] sm:$0xff] %vm488, %v483
    %497 = vrot.lane.b32.xlu0 %v339, 112
    %v498 = vpop.permute.xlu0 %497
    %499 = vrot.lane.b32.xlu0 %v342, 112
    %v500 = vpop.permute.xlu0 %499
    %501 = vrot.lane.b32.xlu0 %v345, 112
    %v502 = vpop.permute.xlu0 %501
    %503 = vrot.lane.b32.xlu0 %v348, 112
    %v504 = vpop.permute.xlu0 %503
    %vm509 = vcmask 1048448
    %510 = vst.msk [vmem:[#allocation2] sm:$0xff] %vm509, %v498
    %511 = vst.msk [vmem:[#allocation2 + $0x28] sm:$0xff] %vm509, %v500
    %512 = vst.msk [vmem:[#allocation2 + $0x50] sm:$0xff] %vm509, %v502
    %513 = vst.msk [vmem:[#allocation2 + $0x78] sm:$0xff] %vm509, %v504
    %514 = vst.msk [vmem:[#allocation2 + $0x8] sm:$0xff] %vm362, %v351
    %515 = vst.msk [vmem:[#allocation2 + $0x30] sm:$0xff] %vm362, %v354
    %516 = vst.msk [vmem:[#allocation2 + $0x58] sm:$0xff] %vm362, %v357
    %517 = vst.msk [vmem:[#allocation2 + $0x80] sm:$0xff] %vm362, %v360
    %v518 = vld [vmem:[#allocation2] sm:$0xff]
    %v519 = vld [vmem:[#allocation2 + $0x8] sm:$0xff]
    %v520 = vld [vmem:[#allocation2 + $0x28] sm:$0xff]
    %v521 = vld [vmem:[#allocation2 + $0x30] sm:$0xff]
    %v522 = vld [vmem:[#allocation2 + $0x50] sm:$0xff]
    %v523 = vld [vmem:[#allocation2 + $0x58] sm:$0xff]
    %v524 = vld [vmem:[#allocation2 + $0x78] sm:$0xff]
    %v525 = vld [vmem:[#allocation2 + $0x80] sm:$0xff]
    %v526 = vld [vmem:[%s2 + $0x20] sm:$0xff]
    %v527 = vld [vmem:[%s2 + $0x28] sm:$0xff]
    %v528 = vld [vmem:[%s2 + $0x30] sm:$0xff]
    %v529 = vld [vmem:[%s2 + $0x38] sm:$0xff]
    %v530 = vld [vmem:[%s2 + $0x40] sm:$0xff]
    %v531 = vld [vmem:[%s2 + $0x48] sm:$0xff]
    %v532 = vld [vmem:[%s2 + $0x50] sm:$0xff]
    %v533 = vld [vmem:[%s2 + $0x58] sm:$0xff]
    %v534 = vld [vmem:[%s2 + $0x60] sm:$0xff]
    %v535 = vld [vmem:[%s2 + $0x68] sm:$0xff]
    %v536 = vld [vmem:[%s2 + $0x70] sm:$0xff]
    %v537 = vld [vmem:[%s2 + $0x78] sm:$0xff]
    %v538 = vld [vmem:[%s2 + $0x80] sm:$0xff]
    %v539 = vld [vmem:[%s2 + $0x88] sm:$0xff]
    %v540 = vld [vmem:[%s2 + $0x90] sm:$0xff]
    %v541 = vld [vmem:[%s2 + $0x98] sm:$0xff]
    %v542 = vld [vmem:[%s2 + $0xa0] sm:$0xff]
    %v543 = vld [vmem:[%s2 + $0xa8] sm:$0xff]
    %v544 = vld [vmem:[%s3 + $0x181] ss:$0 sm:$0xff]
    %v546 = vsel %vm362, %v519, 0
    %v549 = vsel %vm362, %v521, 0
    %v552 = vsel %vm362, %v523, 0
    %v555 = vsel %vm362, %v525, 0
    %557 = vmatpush.msra.mxu0 %v541
    %558 = vmatpush.msra.mxu0 %v540
    %559 = vmatpush.msra.mxu0 %v539
    %560 = vmatpush.msra.mxu0 %v538
    %561 = vmatpush.msra.mxu0 %v537
    %562 = vmatpush.msra.mxu0 %v536
    %563 = vmatpush.msra.mxu0 %v535
    %564 = vmatpush.msra.mxu0 %v534
    %565 = vmatpush.msra.mxu0 %v533
    %566 = vmatpush.msra.mxu0 %v532
    %567 = vmatpush.msra.mxu0 %v531
    %568 = vmatpush.msra.mxu0 %v530
    %569 = vmatpush.msra.mxu0 %v529
    %570 = vmatpush.msra.mxu0 %v528
    %571 = vmatpush.msra.mxu0 %v527
    %572 = vmatpush.msra.mxu0 %v526
    %573 = vmatmul.f32.gmra.mxu0 %v518
    %v574 = vpop.f32.mrf.mxu0
    %v575 = vadd.f32 %v544, %v574
    %576 = vmatmul.f32.gmra.mxu0 %v520
    %v577 = vpop.f32.mrf.mxu0
    %v578 = vadd.f32 %v544, %v577
    %579 = vmatmul.f32.gmra.mxu0 %v522
    %v580 = vpop.f32.mrf.mxu0
    %v581 = vadd.f32 %v544, %v580
    %582 = vmatmul.f32.gmra.mxu0 %v524
    %v583 = vpop.f32.mrf.mxu0
    %v584 = vadd.f32 %v544, %v583
    %585 = vdwg.mxu0
    %586 = vmatpush.msra.mxu0 0.0
    %587 = vmatpush.msra.mxu0 0.0
    %588 = vmatpush.msra.mxu0 0.0
    %589 = vmatpush.msra.mxu0 0.0
    %590 = vmatpush.msra.mxu0 0.0
    %591 = vmatpush.msra.mxu0 0.0
    %592 = vmatpush.msra.mxu0 0.0
    %593 = vmatpush.msra.mxu0 0.0
    %594 = vmatpush.msra.mxu0 0.0
    %595 = vmatpush.msra.mxu0 0.0
    %596 = vmatpush.msra.mxu0 0.0
    %597 = vmatpush.msra.mxu0 0.0
    %598 = vmatpush.msra.mxu0 0.0
    %599 = vmatpush.msra.mxu0 0.0
    %600 = vmatpush.msra.mxu0 %v543
    %601 = vmatpush.msra.mxu0 %v542
    %602 = vmatmul.f32.gmra.mxu0 %v546
    %v603 = vpop.f32.mrf.mxu0
    %v604 = vadd.f32 %v575, %v603
    %605 = vmatmul.f32.gmra.mxu0 %v549
    %v606 = vpop.f32.mrf.mxu0
    %v607 = vadd.f32 %v578, %v606
    %608 = vmatmul.f32.gmra.mxu0 %v552
    %v609 = vpop.f32.mrf.mxu0
    %v610 = vadd.f32 %v581, %v609
    %611 = vmatmul.f32.gmra.mxu0 %v555
    %v612 = vpop.f32.mrf.mxu0
    %v613 = vadd.f32 %v584, %v612
    %614 = vdwg.mxu0
    %vm615 = vcmp.ge.f32.partialorder %v604, 0.0
    %vm616 = vcmp.ge.f32.partialorder %v607, 0.0
    %vm617 = vcmp.ge.f32.partialorder %v610, 0.0
    %vm618 = vcmp.ge.f32.partialorder %v613, 0.0
    %v619 = vmul.f32 %v604, 0.2
    %v620 = vmul.f32 %v607, 0.2
    %v621 = vmul.f32 %v610, 0.2
    %v622 = vmul.f32 %v613, 0.2
    %v623 = vsel %vm615, %v604, %v619
    %v624 = vsel %vm616, %v607, %v620
    %v625 = vsel %vm617, %v610, %v621
    %v626 = vsel %vm618, %v613, %v622
    %v627 = vsel %vm39, %v623, 0.0
    %v628 = vsel %vm39, %v624, 0.0
    %v629 = vadd.f32 %v627, %v628
    %v630 = vsel %vm39, %v625, 0.0
    %v631 = vadd.f32 %v629, %v630
    %v632 = vsel %vm39, %v626, 0.0
    %v633 = vadd.f32 %v631, %v632
    %v634 = vrot.slane %v633, 4
    %v635 = vadd.f32 %v633, %v634
    %v636 = vrot.slane %v635, 2
    %v637 = vadd.f32 %v635, %v636
    %v638 = vrot.slane %v637, 1
    %v639 = vadd.f32 %v637, %v638
    %v640 = vmul.f32 %v639, 0.03125
    %v641 = vmul.f32 %v623, %v623
    %v642 = vmul.f32 %v624, %v624
    %v643 = vmul.f32 %v625, %v625
    %v644 = vmul.f32 %v626, %v626
    %v645 = vsel %vm39, %v641, 0.0
    %v646 = vsel %vm39, %v642, 0.0
    %v647 = vadd.f32 %v645, %v646
    %v648 = vsel %vm39, %v643, 0.0
    %v649 = vadd.f32 %v647, %v648
    %v650 = vsel %vm39, %v644, 0.0
    %v651 = vadd.f32 %v649, %v650
    %v652 = vrot.slane %v651, 4
    %v653 = vadd.f32 %v651, %v652
    %v654 = vrot.slane %v653, 2
    %v655 = vadd.f32 %v653, %v654
    %v656 = vrot.slane %v655, 1
    %v657 = vadd.f32 %v655, %v656
    %v658 = vmul.f32 %v657, 0.03125
    %v659 = vsub.f32 %v623, %v640
    %v660 = vsub.f32 %v624, %v640
    %v661 = vsub.f32 %v625, %v640
    %v662 = vsub.f32 %v626, %v640
    %v663 = vmul.f32 %v640, %v640
    %v664 = vsub.f32 %v658, %v663
    %v665 = vadd.f32 %v664, 0.8
    %v666 = vrsqrt.pop %v665
    %v667 = vmul.f32 %v666, %v665
    %v668 = vmul.f32 %v667, %v666
    %v669 = vmul.f32 0.5, %v668
    %v670 = vsub.f32 1.5, %v669
    %v671 = vmul.f32 %v666, %v670
    %vm672 = vweird.f32 %v665
    %vm673 = vweird.f32 %v666
    %vm674 = vmor %vm672, %vm673
    %v675 = vsel %vm674, %v666, %v671
    %v676 = vmul.f32 %v659, %v675
    %v677 = vmul.f32 %v660, %v675
    %v678 = vmul.f32 %v661, %v675
    %v679 = vmul.f32 %v662, %v675
    %v680 = vld [vmem:[%s3 + $0x182] ss:$0 sm:$0xff]
    %v681 = vmul.f32 %v676, %v680
    %v682 = vmul.f32 %v677, %v680
    %v683 = vmul.f32 %v678, %v680
    %v684 = vmul.f32 %v679, %v680
    %v685 = vld [vmem:[%s3 + $0x183] ss:$0 sm:$0xff]
    %v686 = vadd.f32 %v681, %v685
    %v687 = vadd.f32 %v682, %v685
    %v688 = vadd.f32 %v683, %v685
    %v689 = vadd.f32 %v684, %v685
    %v690 = vld [vmem:[%s1 + $0x120] sm:$0xff]
    %v691 = vld [vmem:[%s1 + $0x128] sm:$0xff]
    %v692 = vld [vmem:[%s1 + $0x130] sm:$0xff]
    %v693 = vld [vmem:[%s1 + $0x138] sm:$0xff]
    %v694 = vld [vmem:[%s1 + $0x140] sm:$0xff]
    %v695 = vld [vmem:[%s1 + $0x148] sm:$0xff]
    %v696 = vld [vmem:[%s1 + $0x150] sm:$0xff]
    %v697 = vld [vmem:[%s1 + $0x158] sm:$0xff]
    %v698 = vld [vmem:[%s1 + $0x160] sm:$0xff]
    %v700 = vsel %vm39, %v690, 0
    %v703 = vsel %vm39, %v691, 0
    %v706 = vsel %vm39, %v692, 0
    %v709 = vsel %vm39, %v693, 0
    %v712 = vsel %vm39, %v694, 0
    %v715 = vsel %vm39, %v695, 0
    %v718 = vsel %vm39, %v696, 0
    %v721 = vsel %vm39, %v697, 0
    %v724 = vsel %vm39, %v698, 0
    %726 = vmatpush.msra.mxu0 0.0
    %727 = vmatpush.msra.mxu0 0.0
    %728 = vmatpush.msra.mxu0 0.0
    %729 = vmatpush.msra.mxu0 0.0
    %730 = vmatpush.msra.mxu0 0.0
    %731 = vmatpush.msra.mxu0 0.0
    %732 = vmatpush.msra.mxu0 0.0
    %733 = vmatpush.msra.mxu0 0.0
    %734 = vmatpush.msra.mxu0 0.0
    %735 = vmatpush.msra.mxu0 0.0
    %736 = vmatpush.msra.mxu0 0.0
    %737 = vmatpush.msra.mxu0 0.0
    %738 = vmatpush.msra.mxu0 %v689
    %739 = vmatpush.msra.mxu0 %v688
    %740 = vmatpush.msra.mxu0 %v687
    %741 = vmatpush.msra.mxu0 %v686
    %742 = vmatmul.f32.gmra.mxu0 %v700
    %v743 = vpop.f32.mrf.mxu0
    %v744 = vadd.f32 0.0, %v743
    %745 = vmatmul.f32.gmra.mxu0 %v703
    %v746 = vpop.f32.mrf.mxu0
    %v747 = vadd.f32 0.0, %v746
    %748 = vmatmul.f32.gmra.mxu0 %v706
    %v749 = vpop.f32.mrf.mxu0
    %v750 = vadd.f32 0.0, %v749
    %751 = vmatmul.f32.gmra.mxu0 %v709
    %v752 = vpop.f32.mrf.mxu0
    %v753 = vadd.f32 0.0, %v752
    %754 = vmatmul.f32.gmra.mxu0 %v712
    %v755 = vpop.f32.mrf.mxu0
    %v756 = vadd.f32 0.0, %v755
    %757 = vmatmul.f32.gmra.mxu0 %v715
    %v758 = vpop.f32.mrf.mxu0
    %v759 = vadd.f32 0.0, %v758
    %760 = vmatmul.f32.gmra.mxu0 %v718
    %v761 = vpop.f32.mrf.mxu0
    %v762 = vadd.f32 0.0, %v761
    %763 = vmatmul.f32.gmra.mxu0 %v721
    %v764 = vpop.f32.mrf.mxu0
    %v765 = vadd.f32 0.0, %v764
    %766 = vmatmul.f32.gmra.mxu0 %v724
    %v767 = vpop.f32.mrf.mxu0
    %v768 = vadd.f32 0.0, %v767
    %769 = vdwg.mxu0
    %770 = vst.msk [vmem:[#allocation2] sm:$0xff] %vm39, %v744
    %772 = vrot.lane.b32.xlu0 %v747, 32
    %v773 = vpop.permute.xlu0 %772
    %vm775 = vcmask 523520
    %776 = vst.msk [vmem:[#allocation2] sm:$0xff] %vm775, %v773
    %778 = vrot.lane.b32.xlu0 %v750, 64
    %v779 = vpop.permute.xlu0 %778
    %vm781 = vcmask 785920
    %782 = vst.msk [vmem:[#allocation2] sm:$0xff] %vm781, %v779
    %784 = vrot.lane.b32.xlu0 %v753, 96
    %v785 = vpop.permute.xlu0 %784
    %vm787 = vcmask 1048320
    %788 = vst.msk [vmem:[#allocation2] sm:$0xff] %vm787, %v785
    %789 = vst.msk [vmem:[#allocation2 + $0x8] sm:$0xff] %vm39, %v756
    %791 = vrot.lane.b32.xlu0 %v759, 32
    %v792 = vpop.permute.xlu0 %791
    %794 = vst.msk [vmem:[#allocation2 + $0x8] sm:$0xff] %vm775, %v792
    %796 = vrot.lane.b32.xlu0 %v762, 64
    %v797 = vpop.permute.xlu0 %796
    %799 = vst.msk [vmem:[#allocation2 + $0x8] sm:$0xff] %vm781, %v797
    %801 = vrot.lane.b32.xlu0 %v765, 96
    %v802 = vpop.permute.xlu0 %801
    %804 = vst.msk [vmem:[#allocation2 + $0x8] sm:$0xff] %vm787, %v802
    %805 = vst.msk [vmem:[#allocation2 + $0x10] sm:$0xff] %vm39, %v768
    %v806 = vld [vmem:[#allocation2] sm:$0xff]
    %v807 = vld [vmem:[#allocation2 + $0x8] sm:$0xff]
    %v808 = vld [vmem:[#allocation2 + $0x10] sm:$0xff]
    %v809 = vld [vmem:[%s2 + $0xb0] sm:$0xff]
    %v810 = vld [vmem:[%s2 + $0xb8] sm:$0xff]
    %v811 = vld [vmem:[%s2 + $0xc0] sm:$0xff]
    %v812 = vld [vmem:[%s2 + $0xc8] sm:$0xff]
    %v813 = vld [vmem:[%s2 + $0xd0] sm:$0xff]
    %v814 = vld [vmem:[%s2 + $0xd8] sm:$0xff]
    %v815 = vld [vmem:[%s2 + $0xe0] sm:$0xff]
    %v816 = vld [vmem:[%s2 + $0xe8] sm:$0xff]
    %v817 = vld [vmem:[%s2 + $0xf0] sm:$0xff]
    %v818 = vld [vmem:[%s2 + $0xf8] sm:$0xff]
    %v819 = vld [vmem:[%s2 + $0x100] sm:$0xff]
    %v820 = vld [vmem:[%s2 + $0x108] sm:$0xff]
    %v821 = vld [vmem:[%s2 + $0x110] sm:$0xff]
    %v822 = vld [vmem:[%s2 + $0x118] sm:$0xff]
    %v823 = vld [vmem:[%s2 + $0x120] sm:$0xff]
    %v824 = vld [vmem:[%s2 + $0x128] sm:$0xff]
    %v825 = vld [vmem:[%s2 + $0x130] sm:$0xff]
    %v826 = vld [vmem:[%s2 + $0x138] sm:$0xff]
    %v827 = vld [vmem:[%s2 + $0x140] sm:$0xff]
    %v828 = vld [vmem:[%s2 + $0x148] sm:$0xff]
    %v829 = vld [vmem:[%s2 + $0x150] sm:$0xff]
    %v830 = vld [vmem:[%s2 + $0x158] sm:$0xff]
    %v831 = vld [vmem:[%s2 + $0x160] sm:$0xff]
    %v832 = vld [vmem:[%s2 + $0x168] sm:$0xff]
    %v833 = vld [vmem:[%s2 + $0x170] sm:$0xff]
    %v834 = vld [vmem:[%s2 + $0x178] sm:$0xff]
    %v835 = vld [vmem:[%s2 + $0x180] sm:$0xff]
    %v836 = vld [vmem:[%s2 + $0x188] sm:$0xff]
    %v837 = vld [vmem:[%s2 + $0x190] sm:$0xff]
    %v838 = vld [vmem:[%s2 + $0x198] sm:$0xff]
    %v839 = vld [vmem:[%s2 + $0x1a0] sm:$0xff]
    %v840 = vld [vmem:[%s2 + $0x1a8] sm:$0xff]
    %v841 = vld [vmem:[%s2 + $0x1b0] sm:$0xff]
    %v842 = vld [vmem:[%s2 + $0x1b8] sm:$0xff]
    %v843 = vld [vmem:[%s2 + $0x1c0] sm:$0xff]
    %v844 = vld [vmem:[%s2 + $0x1c8] sm:$0xff]
    %v845 = vld [vmem:[%s3 + $0x184] ss:$0 sm:$0xff]
    %v847 = vsel %vm39, %v808, 0
    %849 = vmatpush.msra.mxu0 %v824
    %850 = vmatpush.msra.mxu0 %v823
    %851 = vmatpush.msra.mxu0 %v822
    %852 = vmatpush.msra.mxu0 %v821
    %853 = vmatpush.msra.mxu0 %v820
    %854 = vmatpush.msra.mxu0 %v819
    %855 = vmatpush.msra.mxu0 %v818
    %856 = vmatpush.msra.mxu0 %v817
    %857 = vmatpush.msra.mxu0 %v816
    %858 = vmatpush.msra.mxu0 %v815
    %859 = vmatpush.msra.mxu0 %v814
    %860 = vmatpush.msra.mxu0 %v813
    %861 = vmatpush.msra.mxu0 %v812
    %862 = vmatpush.msra.mxu0 %v811
    %863 = vmatpush.msra.mxu0 %v810
    %864 = vmatpush.msra.mxu0 %v809
    %865 = vmatmul.f32.gmra.mxu0 %v806
    %v866 = vpop.f32.mrf.mxu0
    %v867 = vadd.f32 %v845, %v866
    %868 = vdwg.mxu0
    %869 = vmatpush.msra.mxu0 %v840
    %870 = vmatpush.msra.mxu0 %v839
    %871 = vmatpush.msra.mxu0 %v838
    %872 = vmatpush.msra.mxu0 %v837
    %873 = vmatpush.msra.mxu0 %v836
    %874 = vmatpush.msra.mxu0 %v835
    %875 = vmatpush.msra.mxu0 %v834
    %876 = vmatpush.msra.mxu0 %v833
    %877 = vmatpush.msra.mxu0 %v832
    %878 = vmatpush.msra.mxu0 %v831
    %879 = vmatpush.msra.mxu0 %v830
    %880 = vmatpush.msra.mxu0 %v829
    %881 = vmatpush.msra.mxu0 %v828
    %882 = vmatpush.msra.mxu0 %v827
    %883 = vmatpush.msra.mxu0 %v826
    %884 = vmatpush.msra.mxu0 %v825
    %885 = vmatmul.f32.gmra.mxu0 %v807
    %v886 = vpop.f32.mrf.mxu0
    %v887 = vadd.f32 %v867, %v886
    %888 = vdwg.mxu0
    %889 = vmatpush.msra.mxu0 0.0
    %890 = vmatpush.msra.mxu0 0.0
    %891 = vmatpush.msra.mxu0 0.0
    %892 = vmatpush.msra.mxu0 0.0
    %893 = vmatpush.msra.mxu0 0.0
    %894 = vmatpush.msra.mxu0 0.0
    %895 = vmatpush.msra.mxu0 0.0
    %896 = vmatpush.msra.mxu0 0.0
    %897 = vmatpush.msra.mxu0 0.0
    %898 = vmatpush.msra.mxu0 0.0
    %899 = vmatpush.msra.mxu0 0.0
    %900 = vmatpush.msra.mxu0 0.0
    %901 = vmatpush.msra.mxu0 %v844
    %902 = vmatpush.msra.mxu0 %v843
    %903 = vmatpush.msra.mxu0 %v842
    %904 = vmatpush.msra.mxu0 %v841
    %905 = vmatmul.f32.gmra.mxu0 %v847
    %v906 = vpop.f32.mrf.mxu0
    %v907 = vadd.f32 %v887, %v906
    %908 = vdwg.mxu0
    %vm909 = vcmp.ge.f32.partialorder %v907, 0.0
    %v910 = vmul.f32 %v907, 0.2
    %v911 = vsel %vm909, %v907, %v910
    %vm912 = vcmask 523264
    %v913 = vsel %vm912, %v911, 0.0
    %v914 = vrot.slane %v913, 4
    %v915 = vadd.f32 %v913, %v914
    %v916 = vrot.slane %v915, 2
    %v917 = vadd.f32 %v915, %v916
    %v918 = vrot.slane %v917, 1
    %v919 = vadd.f32 %v917, %v918
    %v920 = vmul.f32 %v919, 0.125
    %v921 = vmul.f32 %v911, %v911
    %v922 = vsel %vm912, %v921, 0.0
    %v923 = vrot.slane %v922, 4
    %v924 = vadd.f32 %v922, %v923
    %v925 = vrot.slane %v924, 2
    %v926 = vadd.f32 %v924, %v925
    %v927 = vrot.slane %v926, 1
    %v928 = vadd.f32 %v926, %v927
    %v929 = vmul.f32 %v928, 0.125
    %v930 = vsub.f32 %v911, %v920
    %v931 = vmul.f32 %v920, %v920
    %v932 = vsub.f32 %v929, %v931
    %v933 = vadd.f32 %v932, 0.8
    %v934 = vrsqrt.pop %v933
    %v935 = vmul.f32 %v934, %v933
    %v936 = vmul.f32 %v935, %v934
    %v937 = vmul.f32 0.5, %v936
    %v938 = vsub.f32 1.5, %v937
    %v939 = vmul.f32 %v934, %v938
    %vm940 = vweird.f32 %v933
    %vm941 = vweird.f32 %v934
    %vm942 = vmor %vm940, %vm941
    %v943 = vsel %vm942, %v934, %v939
    %v944 = vmul.f32 %v930, %v943
    %v945 = vld [vmem:[%s3 + $0x185] ss:$0 sm:$0xff]
    %v946 = vmul.f32 %v944, %v945
    %v947 = vld [vmem:[%s3 + $0x186] ss:$0 sm:$0xff]
    %v948 = vadd.f32 %v946, %v947
    %v949 = vld [vmem:[%s1 + $0x168] sm:$0xff]
    %v950 = vld [vmem:[%s1 + $0x170] sm:$0xff]
    %v951 = vld [vmem:[%s1 + $0x178] sm:$0xff]
    %v952 = vld [vmem:[%s1 + $0x180] sm:$0xff]
    %v953 = vld [vmem:[%s1 + $0x188] sm:$0xff]
    %v954 = vld [vmem:[%s1 + $0x190] sm:$0xff]
    %v955 = vld [vmem:[%s1 + $0x198] sm:$0xff]
    %v956 = vld [vmem:[%s1 + $0x1a0] sm:$0xff]
    %v957 = vld [vmem:[%s1 + $0x1a8] sm:$0xff]
    %vm958 = vcmask 64512
    %v960 = vsel %vm958, %v949, 0
    %v963 = vsel %vm958, %v950, 0
    %v966 = vsel %vm958, %v951, 0
    %v969 = vsel %vm958, %v952, 0
    %v972 = vsel %vm958, %v953, 0
    %v975 = vsel %vm958, %v954, 0
    %v978 = vsel %vm958, %v955, 0
    %v981 = vsel %vm958, %v956, 0
    %v984 = vsel %vm958, %v957, 0
    %986 = vmatpush.msra.mxu0 0.0
    %987 = vmatpush.msra.mxu0 0.0
    %988 = vmatpush.msra.mxu0 0.0
    %989 = vmatpush.msra.mxu0 0.0
    %990 = vmatpush.msra.mxu0 0.0
    %991 = vmatpush.msra.mxu0 0.0
    %992 = vmatpush.msra.mxu0 0.0
    %993 = vmatpush.msra.mxu0 0.0
    %994 = vmatpush.msra.mxu0 0.0
    %995 = vmatpush.msra.mxu0 0.0
    %996 = vmatpush.msra.mxu0 0.0
    %997 = vmatpush.msra.mxu0 0.0
    %998 = vmatpush.msra.mxu0 0.0
    %999 = vmatpush.msra.mxu0 0.0
    %1000 = vmatpush.msra.mxu0 0.0
    %1001 = vmatpush.msra.mxu0 %v948
    %1002 = vmatmul.f32.gmra.mxu0 %v960
    %v1003 = vpop.f32.mrf.mxu0
    %v1004 = vadd.f32 0.0, %v1003
    %1005 = vmatmul.f32.gmra.mxu0 %v963
    %v1006 = vpop.f32.mrf.mxu0
    %v1007 = vadd.f32 0.0, %v1006
    %1008 = vmatmul.f32.gmra.mxu0 %v966
    %v1009 = vpop.f32.mrf.mxu0
    %v1010 = vadd.f32 0.0, %v1009
    %1011 = vmatmul.f32.gmra.mxu0 %v969
    %v1012 = vpop.f32.mrf.mxu0
    %v1013 = vadd.f32 0.0, %v1012
    %1014 = vmatmul.f32.gmra.mxu0 %v972
    %v1015 = vpop.f32.mrf.mxu0
    %v1016 = vadd.f32 0.0, %v1015
    %1017 = vmatmul.f32.gmra.mxu0 %v975
    %v1018 = vpop.f32.mrf.mxu0
    %v1019 = vadd.f32 0.0, %v1018
    %1020 = vmatmul.f32.gmra.mxu0 %v978
    %v1021 = vpop.f32.mrf.mxu0
    %v1022 = vadd.f32 0.0, %v1021
    %1023 = vmatmul.f32.gmra.mxu0 %v981
    %v1024 = vpop.f32.mrf.mxu0
    %v1025 = vadd.f32 0.0, %v1024
    %1026 = vmatmul.f32.gmra.mxu0 %v984
    %v1027 = vpop.f32.mrf.mxu0
    %v1028 = vadd.f32 0.0, %v1027
    %1029 = vdwg.mxu0
    %vm1030 = vcmask 517120
    %1031 = vst.msk [vmem:[#allocation2] sm:$0x3] %vm1030, %v1004
    %1033 = vrot.lane.b32.xlu0 %v1007, 64
    %v1034 = vpop.permute.xlu0 %1033
    %vm1036 = vcmask 1041920
    %1037 = vst.msk [vmem:[#allocation2] sm:$0x3] %vm1036, %v1034
    %1038 = vst.msk [vmem:[#allocation2 + $0x8] sm:$0x3] %vm1030, %v1010
    %1040 = vrot.lane.b32.xlu0 %v1013, 64
    %v1041 = vpop.permute.xlu0 %1040
    %1043 = vst.msk [vmem:[#allocation2 + $0x8] sm:$0x3] %vm1036, %v1041
    %1044 = vst.msk [vmem:[#allocation2 + $0x10] sm:$0x3] %vm1030, %v1016
    %1046 = vrot.lane.b32.xlu0 %v1019, 64
    %v1047 = vpop.permute.xlu0 %1046
    %1049 = vst.msk [vmem:[#allocation2 + $0x10] sm:$0x3] %vm1036, %v1047
    %1050 = vst.msk [vmem:[#allocation2 + $0x18] sm:$0x3] %vm1030, %v1022
    %1052 = vrot.lane.b32.xlu0 %v1025, 64
    %v1053 = vpop.permute.xlu0 %1052
    %1055 = vst.msk [vmem:[#allocation2 + $0x18] sm:$0x3] %vm1036, %v1053
    %1056 = vst.msk [vmem:[#allocation2 + $0x20] sm:$0x3] %vm1030, %v1028
    %v1057 = vld [vmem:[#allocation2] sm:$0x3]
    %v1058 = vld [vmem:[#allocation2 + $0x8] sm:$0x3]
    %v1059 = vld [vmem:[#allocation2 + $0x10] sm:$0x3]
    %v1060 = vld [vmem:[#allocation2 + $0x18] sm:$0x3]
    %v1061 = vld [vmem:[#allocation2 + $0x20] sm:$0x3]
    %v1062 = vld [vmem:[%s2 + $0x1d0] sm:$0xff]
    %v1063 = vld [vmem:[%s2 + $0x1d8] sm:$0xff]
    %v1064 = vld [vmem:[%s2 + $0x1e0] sm:$0xff]
    %v1065 = vld [vmem:[%s2 + $0x1e8] sm:$0xff]
    %v1066 = vld [vmem:[%s2 + $0x1f0] sm:$0xff]
    %v1067 = vld [vmem:[%s2 + $0x1f8] sm:$0xff]
    %v1068 = vld [vmem:[%s2 + $0x200] sm:$0xff]
    %v1069 = vld [vmem:[%s2 + $0x208] sm:$0xff]
    %v1070 = vld [vmem:[%s2 + $0x210] sm:$0xff]
    %v1071 = vld [vmem:[%s2 + $0x218] sm:$0xff]
    %v1072 = vld [vmem:[%s2 + $0x220] sm:$0xff]
    %v1073 = vld [vmem:[%s2 + $0x228] sm:$0xff]
    %v1074 = vld [vmem:[%s2 + $0x230] sm:$0xff]
    %v1075 = vld [vmem:[%s2 + $0x238] sm:$0xff]
    %v1076 = vld [vmem:[%s2 + $0x240] sm:$0xff]
    %v1077 = vld [vmem:[%s2 + $0x248] sm:$0xff]
    %v1078 = vld [vmem:[%s2 + $0x250] sm:$0xff]
    %v1079 = vld [vmem:[%s2 + $0x258] sm:$0xff]
    %v1080 = vld [vmem:[%s2 + $0x260] sm:$0xff]
    %v1081 = vld [vmem:[%s2 + $0x268] sm:$0xff]
    %v1082 = vld [vmem:[%s2 + $0x270] sm:$0xff]
    %v1083 = vld [vmem:[%s2 + $0x278] sm:$0xff]
    %v1084 = vld [vmem:[%s2 + $0x280] sm:$0xff]
    %v1085 = vld [vmem:[%s2 + $0x288] sm:$0xff]
    %v1086 = vld [vmem:[%s2 + $0x290] sm:$0xff]
    %v1087 = vld [vmem:[%s2 + $0x298] sm:$0xff]
    %v1088 = vld [vmem:[%s2 + $0x2a0] sm:$0xff]
    %v1089 = vld [vmem:[%s2 + $0x2a8] sm:$0xff]
    %v1090 = vld [vmem:[%s2 + $0x2b0] sm:$0xff]
    %v1091 = vld [vmem:[%s2 + $0x2b8] sm:$0xff]
    %v1092 = vld [vmem:[%s2 + $0x2c0] sm:$0xff]
    %v1093 = vld [vmem:[%s2 + $0x2c8] sm:$0xff]
    %v1094 = vld [vmem:[%s2 + $0x2d0] sm:$0xff]
    %v1095 = vld [vmem:[%s2 + $0x2d8] sm:$0xff]
    %v1096 = vld [vmem:[%s2 + $0x2e0] sm:$0xff]
    %v1097 = vld [vmem:[%s2 + $0x2e8] sm:$0xff]
    %v1098 = vld [vmem:[%s2 + $0x2f0] sm:$0xff]
    %v1099 = vld [vmem:[%s2 + $0x2f8] sm:$0xff]
    %v1100 = vld [vmem:[%s2 + $0x300] sm:$0xff]
    %v1101 = vld [vmem:[%s2 + $0x308] sm:$0xff]
    %v1102 = vld [vmem:[%s2 + $0x310] sm:$0xff]
    %v1103 = vld [vmem:[%s2 + $0x318] sm:$0xff]
    %v1104 = vld [vmem:[%s2 + $0x320] sm:$0xff]
    %v1105 = vld [vmem:[%s2 + $0x328] sm:$0xff]
    %v1106 = vld [vmem:[%s2 + $0x330] sm:$0xff]
    %v1107 = vld [vmem:[%s2 + $0x338] sm:$0xff]
    %v1108 = vld [vmem:[%s2 + $0x340] sm:$0xff]
    %v1109 = vld [vmem:[%s2 + $0x348] sm:$0xff]
    %v1110 = vld [vmem:[%s2 + $0x350] sm:$0xff]
    %v1111 = vld [vmem:[%s2 + $0x358] sm:$0xff]
    %v1112 = vld [vmem:[%s2 + $0x360] sm:$0xff]
    %v1113 = vld [vmem:[%s2 + $0x368] sm:$0xff]
    %v1114 = vld [vmem:[%s2 + $0x370] sm:$0xff]
    %v1115 = vld [vmem:[%s2 + $0x378] sm:$0xff]
    %v1116 = vld [vmem:[%s2 + $0x380] sm:$0xff]
    %v1117 = vld [vmem:[%s2 + $0x388] sm:$0xff]
    %v1118 = vld [vmem:[%s2 + $0x390] sm:$0xff]
    %v1119 = vld [vmem:[%s2 + $0x398] sm:$0xff]
    %v1120 = vld [vmem:[%s2 + $0x3a0] sm:$0xff]
    %v1121 = vld [vmem:[%s2 + $0x3a8] sm:$0xff]
    %v1122 = vld [vmem:[%s2 + $0x3b0] sm:$0xff]
    %v1123 = vld [vmem:[%s2 + $0x3b8] sm:$0xff]
    %v1124 = vld [vmem:[%s2 + $0x3c0] sm:$0xff]
    %v1125 = vld [vmem:[%s2 + $0x3c8] sm:$0xff]
    %v1126 = vld [vmem:[%s2 + $0x3d0] sm:$0xff]
    %v1127 = vld [vmem:[%s2 + $0x3d8] sm:$0xff]
    %v1128 = vld [vmem:[%s2 + $0x3e0] sm:$0xff]
    %v1129 = vld [vmem:[%s2 + $0x3e8] sm:$0xff]
    %v1130 = vld [vmem:[%s2 + $0x3f0] sm:$0xff]
    %v1131 = vld [vmem:[%s2 + $0x3f8] sm:$0xff]
    %v1132 = vld [vmem:[%s2 + $0x400] sm:$0xff]
    %v1133 = vld [vmem:[%s2 + $0x408] sm:$0xff]
    %v1134 = vld [vmem:[%s3 + $0x187] ss:$0 sm:$0xff]
    %v1136 = vsel %vm912, %v1061, 0
    %1138 = vmatpush.msra.mxu0 %v1077
    %1139 = vmatpush.msra.mxu0 %v1076
    %1140 = vmatpush.msra.mxu0 %v1075
    %1141 = vmatpush.msra.mxu0 %v1074
    %1142 = vmatpush.msra.mxu0 %v1073
    %1143 = vmatpush.msra.mxu0 %v1072
    %1144 = vmatpush.msra.mxu0 %v1071
    %1145 = vmatpush.msra.mxu0 %v1070
    %1146 = vmatpush.msra.mxu0 %v1069
    %1147 = vmatpush.msra.mxu0 %v1068
    %1148 = vmatpush.msra.mxu0 %v1067
    %1149 = vmatpush.msra.mxu0 %v1066
    %1150 = vmatpush.msra.mxu0 %v1065
    %1151 = vmatpush.msra.mxu0 %v1064
    %1152 = vmatpush.msra.mxu0 %v1063
    %1153 = vmatpush.msra.mxu0 %v1062
    %1154 = vmatmul.f32.gmra.mxu0 %v1057
    %v1155 = vpop.f32.mrf.mxu0
    %v1156 = vadd.f32 %v1134, %v1155
    %1157 = vdwg.mxu0
    %1158 = vmatpush.msra.mxu0 %v1093
    %1159 = vmatpush.msra.mxu0 %v1092
    %1160 = vmatpush.msra.mxu0 %v1091
    %1161 = vmatpush.msra.mxu0 %v1090
    %1162 = vmatpush.msra.mxu0 %v1089
    %1163 = vmatpush.msra.mxu0 %v1088
    %1164 = vmatpush.msra.mxu0 %v1087
    %1165 = vmatpush.msra.mxu0 %v1086
    %1166 = vmatpush.msra.mxu0 %v1085
    %1167 = vmatpush.msra.mxu0 %v1084
    %1168 = vmatpush.msra.mxu0 %v1083
    %1169 = vmatpush.msra.mxu0 %v1082
    %1170 = vmatpush.msra.mxu0 %v1081
    %1171 = vmatpush.msra.mxu0 %v1080
    %1172 = vmatpush.msra.mxu0 %v1079
    %1173 = vmatpush.msra.mxu0 %v1078
    %1174 = vmatmul.f32.gmra.mxu0 %v1058
    %v1175 = vpop.f32.mrf.mxu0
    %v1176 = vadd.f32 %v1156, %v1175
    %1177 = vdwg.mxu0
    %1178 = vmatpush.msra.mxu0 %v1109
    %1179 = vmatpush.msra.mxu0 %v1108
    %1180 = vmatpush.msra.mxu0 %v1107
    %1181 = vmatpush.msra.mxu0 %v1106
    %1182 = vmatpush.msra.mxu0 %v1105
    %1183 = vmatpush.msra.mxu0 %v1104
    %1184 = vmatpush.msra.mxu0 %v1103
    %1185 = vmatpush.msra.mxu0 %v1102
    %1186 = vmatpush.msra.mxu0 %v1101
    %1187 = vmatpush.msra.mxu0 %v1100
    %1188 = vmatpush.msra.mxu0 %v1099
    %1189 = vmatpush.msra.mxu0 %v1098
    %1190 = vmatpush.msra.mxu0 %v1097
    %1191 = vmatpush.msra.mxu0 %v1096
    %1192 = vmatpush.msra.mxu0 %v1095
    %1193 = vmatpush.msra.mxu0 %v1094
    %1194 = vmatmul.f32.gmra.mxu0 %v1059
    %v1195 = vpop.f32.mrf.mxu0
    %v1196 = vadd.f32 %v1176, %v1195
    %1197 = vdwg.mxu0
    %1198 = vmatpush.msra.mxu0 %v1125
    %1199 = vmatpush.msra.mxu0 %v1124
    %1200 = vmatpush.msra.mxu0 %v1123
    %1201 = vmatpush.msra.mxu0 %v1122
    %1202 = vmatpush.msra.mxu0 %v1121
    %1203 = vmatpush.msra.mxu0 %v1120
    %1204 = vmatpush.msra.mxu0 %v1119
    %1205 = vmatpush.msra.mxu0 %v1118
    %1206 = vmatpush.msra.mxu0 %v1117
    %1207 = vmatpush.msra.mxu0 %v1116
    %1208 = vmatpush.msra.mxu0 %v1115
    %1209 = vmatpush.msra.mxu0 %v1114
    %1210 = vmatpush.msra.mxu0 %v1113
    %1211 = vmatpush.msra.mxu0 %v1112
    %1212 = vmatpush.msra.mxu0 %v1111
    %1213 = vmatpush.msra.mxu0 %v1110
    %1214 = vmatmul.f32.gmra.mxu0 %v1060
    %v1215 = vpop.f32.mrf.mxu0
    %v1216 = vadd.f32 %v1196, %v1215
    %1217 = vdwg.mxu0
    %1218 = vmatpush.msra.mxu0 0.0
    %1219 = vmatpush.msra.mxu0 0.0
    %1220 = vmatpush.msra.mxu0 0.0
    %1221 = vmatpush.msra.mxu0 0.0
    %1222 = vmatpush.msra.mxu0 0.0
    %1223 = vmatpush.msra.mxu0 0.0
    %1224 = vmatpush.msra.mxu0 0.0
    %1225 = vmatpush.msra.mxu0 0.0
    %1226 = vmatpush.msra.mxu0 %v1133
    %1227 = vmatpush.msra.mxu0 %v1132
    %1228 = vmatpush.msra.mxu0 %v1131
    %1229 = vmatpush.msra.mxu0 %v1130
    %1230 = vmatpush.msra.mxu0 %v1129
    %1231 = vmatpush.msra.mxu0 %v1128
    %1232 = vmatpush.msra.mxu0 %v1127
    %1233 = vmatpush.msra.mxu0 %v1126
    %1234 = vmatmul.f32.gmra.mxu0 %v1136
    %v1235 = vpop.f32.mrf.mxu0
    %v1236 = vadd.f32 %v1216, %v1235
    %1237 = vdwg.mxu0
    %vm1238 = vcmp.ge.f32.partialorder %v1236, 0.0
    %v1239 = vmul.f32 %v1236, 0.2
    %v1240 = vsel %vm1238, %v1236, %v1239
    %vm1241 = vcmask 1041408
    %v1242 = vsel %vm1241, %v1240, 0.0
    %v1243 = vrot.slane %v1242, 4
    %v1244 = vadd.f32 %v1242, %v1243
    %v1245 = vrot.slane %v1244, 2
    %v1246 = vadd.f32 %v1244, %v1245
    %v1247 = vrot.slane %v1246, 1
    %v1248 = vadd.f32 %v1246, %v1247
    %v1249 = vmul.f32 %v1248, 0.5
    %v1250 = vmul.f32 %v1240, %v1240
    %v1251 = vsel %vm1241, %v1250, 0.0
    %v1252 = vrot.slane %v1251, 4
    %v1253 = vadd.f32 %v1251, %v1252
    %v1254 = vrot.slane %v1253, 2
    %v1255 = vadd.f32 %v1253, %v1254
    %v1256 = vrot.slane %v1255, 1
    %v1257 = vadd.f32 %v1255, %v1256
    %v1258 = vmul.f32 %v1257, 0.5
    %v1259 = vsub.f32 %v1240, %v1249
    %v1260 = vmul.f32 %v1249, %v1249
    %v1261 = vsub.f32 %v1258, %v1260
    %v1262 = vadd.f32 %v1261, 0.8
    %v1263 = vrsqrt.pop %v1262
    %v1264 = vmul.f32 %v1263, %v1262
    %v1265 = vmul.f32 %v1264, %v1263
    %v1266 = vmul.f32 0.5, %v1265
    %v1267 = vsub.f32 1.5, %v1266
    %v1268 = vmul.f32 %v1263, %v1267
    %vm1269 = vweird.f32 %v1262
    %vm1270 = vweird.f32 %v1263
    %vm1271 = vmor %vm1269, %vm1270
    %v1272 = vsel %vm1271, %v1263, %v1268
    %v1273 = vmul.f32 %v1259, %v1272
    %v1274 = vld [vmem:[%s3 + $0x198] ss:$0 sm:$0xff]
    %v1275 = vmul.f32 %v1273, %v1274
    %v1276 = vld [vmem:[%s3 + $0x199] ss:$0 sm:$0xff]
    %v1277 = vadd.f32 %v1275, %v1276
    %v1278 = vld [vmem:[%s3] sm:$0xff]
    %v1279 = vld [vmem:[%s3 + $0x8] sm:$0xff]
    %v1280 = vld [vmem:[%s3 + $0x10] sm:$0xff]
    %v1281 = vld [vmem:[%s3 + $0x18] sm:$0xff]
    %v1282 = vld [vmem:[%s3 + $0x20] sm:$0xff]
    %v1283 = vld [vmem:[%s3 + $0x28] sm:$0xff]
    %v1284 = vld [vmem:[%s3 + $0x30] sm:$0xff]
    %v1285 = vld [vmem:[%s3 + $0x38] sm:$0xff]
    %v1286 = vld [vmem:[%s3 + $0x40] sm:$0xff]
    %v1287 = vld [vmem:[%s3 + $0x48] sm:$0xff]
    %v1288 = vld [vmem:[%s3 + $0x50] sm:$0xff]
    %v1289 = vld [vmem:[%s3 + $0x58] sm:$0xff]
    %v1290 = vld [vmem:[%s3 + $0x60] sm:$0xff]
    %v1291 = vld [vmem:[%s3 + $0x68] sm:$0xff]
    %v1292 = vld [vmem:[%s3 + $0x70] sm:$0xff]
    %v1293 = vld [vmem:[%s3 + $0x78] sm:$0xff]
    %v1294 = vld [vmem:[%s3 + $0x80] sm:$0xff]
    %v1295 = vld [vmem:[%s3 + $0x88] sm:$0xff]
    %v1296 = vld [vmem:[%s3 + $0x90] sm:$0xff]
    %v1297 = vld [vmem:[%s3 + $0x98] sm:$0xff]
    %v1298 = vld [vmem:[%s3 + $0xa0] sm:$0xff]
    %v1299 = vld [vmem:[%s3 + $0xa8] sm:$0xff]
    %v1300 = vld [vmem:[%s3 + $0xb0] sm:$0xff]
    %v1301 = vld [vmem:[%s3 + $0xb8] sm:$0xff]
    %v1302 = vld [vmem:[%s3 + $0xc0] sm:$0xff]
    %v1303 = vld [vmem:[%s3 + $0xc8] sm:$0xff]
    %v1304 = vld [vmem:[%s3 + $0xd0] sm:$0xff]
    %v1305 = vld [vmem:[%s3 + $0xd8] sm:$0xff]
    %v1306 = vld [vmem:[%s3 + $0xe0] sm:$0xff]
    %v1307 = vld [vmem:[%s3 + $0xe8] sm:$0xff]
    %v1308 = vld [vmem:[%s3 + $0xf0] sm:$0xff]
    %v1309 = vld [vmem:[%s3 + $0xf8] sm:$0xff]
    %v1310 = vld [vmem:[%s3 + $0x100] sm:$0xff]
    %v1311 = vld [vmem:[%s3 + $0x108] sm:$0xff]
    %v1312 = vld [vmem:[%s3 + $0x110] sm:$0xff]
    %v1313 = vld [vmem:[%s3 + $0x118] sm:$0xff]
    %v1314 = vld [vmem:[%s3 + $0x120] sm:$0xff]
    %v1315 = vld [vmem:[%s3 + $0x128] sm:$0xff]
    %v1316 = vld [vmem:[%s3 + $0x130] sm:$0xff]
    %v1317 = vld [vmem:[%s3 + $0x138] sm:$0xff]
    %v1318 = vld [vmem:[%s3 + $0x140] sm:$0xff]
    %v1319 = vld [vmem:[%s3 + $0x148] sm:$0xff]
    %v1320 = vld [vmem:[%s3 + $0x150] sm:$0xff]
    %v1321 = vld [vmem:[%s3 + $0x158] sm:$0xff]
    %v1322 = vld [vmem:[%s3 + $0x160] sm:$0xff]
    %v1323 = vld [vmem:[%s3 + $0x168] sm:$0xff]
    %v1324 = vld [vmem:[%s3 + $0x170] sm:$0xff]
    %v1325 = vld [vmem:[%s3 + $0x178] sm:$0xff]
    %s1326 = scalar_lea.vmem %s3, 410
    %v1327 = vld [vmem:[%s1326] ss:$8 sm:$0x7]
    %v1329 = vperm.slane %v1327, 0
    %v1330 = vperm.slane %v1327, 1
    %v1331 = vperm.slane %v1327, 2
    %1335 = vmatpush.msra.mxu0 %v1323
    %1336 = vmatpush.msra.mxu0 %v1320
    %1337 = vmatpush.msra.mxu0 %v1317
    %1338 = vmatpush.msra.mxu0 %v1314
    %1339 = vmatpush.msra.mxu0 %v1311
    %1340 = vmatpush.msra.mxu0 %v1308
    %1341 = vmatpush.msra.mxu0 %v1305
    %1342 = vmatpush.msra.mxu0 %v1302
    %1343 = vmatpush.msra.mxu0 %v1299
    %1344 = vmatpush.msra.mxu0 %v1296
    %1345 = vmatpush.msra.mxu0 %v1293
    %1346 = vmatpush.msra.mxu0 %v1290
    %1347 = vmatpush.msra.mxu0 %v1287
    %1348 = vmatpush.msra.mxu0 %v1284
    %1349 = vmatpush.msra.mxu0 %v1281
    %1350 = vmatpush.msra.mxu0 %v1278
    %1351 = vmatmul.f32.gmra.mxu0 %v1277
    %v1352 = vpop.f32.mrf.mxu0
    %v1353 = vadd.f32 %v1329, %v1352
    %1354 = vdwg.mxu0
    %1355 = vmatpush.msra.mxu0 %v1324
    %1356 = vmatpush.msra.mxu0 %v1321
    %1357 = vmatpush.msra.mxu0 %v1318
    %1358 = vmatpush.msra.mxu0 %v1315
    %1359 = vmatpush.msra.mxu0 %v1312
    %1360 = vmatpush.msra.mxu0 %v1309
    %1361 = vmatpush.msra.mxu0 %v1306
    %1362 = vmatpush.msra.mxu0 %v1303
    %1363 = vmatpush.msra.mxu0 %v1300
    %1364 = vmatpush.msra.mxu0 %v1297
    %1365 = vmatpush.msra.mxu0 %v1294
    %1366 = vmatpush.msra.mxu0 %v1291
    %1367 = vmatpush.msra.mxu0 %v1288
    %1368 = vmatpush.msra.mxu0 %v1285
    %1369 = vmatpush.msra.mxu0 %v1282
    %1370 = vmatpush.msra.mxu0 %v1279
    %1371 = vmatmul.f32.gmra.mxu0 %v1277
    %v1372 = vpop.f32.mrf.mxu0
    %v1373 = vadd.f32 %v1330, %v1372
    %1374 = vdwg.mxu0
    %1375 = vmatpush.msra.mxu0 %v1325
    %1376 = vmatpush.msra.mxu0 %v1322
    %1377 = vmatpush.msra.mxu0 %v1319
    %1378 = vmatpush.msra.mxu0 %v1316
    %1379 = vmatpush.msra.mxu0 %v1313
    %1380 = vmatpush.msra.mxu0 %v1310
    %1381 = vmatpush.msra.mxu0 %v1307
    %1382 = vmatpush.msra.mxu0 %v1304
    %1383 = vmatpush.msra.mxu0 %v1301
    %1384 = vmatpush.msra.mxu0 %v1298
    %1385 = vmatpush.msra.mxu0 %v1295
    %1386 = vmatpush.msra.mxu0 %v1292
    %1387 = vmatpush.msra.mxu0 %v1289
    %1388 = vmatpush.msra.mxu0 %v1286
    %1389 = vmatpush.msra.mxu0 %v1283
    %1390 = vmatpush.msra.mxu0 %v1280
    %1391 = vmatmul.f32.gmra.mxu0 %v1277
    %v1392 = vpop.f32.mrf.mxu0
    %v1393 = vadd.f32 %v1331, %v1392
    %1394 = vdwg.mxu0
    %v1398 = vrot.slane %v1373, 6
    %v1399 = vrot.slane %v1393, 4
    %v1400 = vsel %vm1241, %v1353, %v1398
    %vm1401 = vcmask 1043456
    %v1402 = vsel %vm1401, %v1400, %v1399
    %1404 = vst [vmem:[#allocation3] sm:$0x3f] %v1402
    // Predicated region
    $region18: #{featurizer_forward.1} parent=1 // pred_check
      _
    $region19: #{featurizer_forward.1} parent=1 // pred_check_branch
      %1406 = sbr.rel (0) target = $region21
    $region20: #{featurizer_forward.1} parent=1 // pred_region
      %1408 = vsyncadd [#allocation4], 0
      %s1410 = sshll.u32 [#allocation3], 4
      %s1411 = int_to_ptr.vmem [resolvable:$true] %s1410
      %s1412 = sshll.u32 %s4, 4
      %s1413 = int_to_ptr.hbm [resolvable:$true] %s1412
      %1415 = dma.vmem_to_hbm [thread:$0]  %s1411, 96, %s1413, [#allocation4]
    $region21: #{featurizer_forward.1} parent=1 // pred_fallthru
      _
    // Predicated region
    $region22: #{featurizer_forward.1} parent=1 // pred_check
      _
    $region23: #{featurizer_forward.1} parent=1 // pred_check_branch
      %1417 = sbr.rel (0) target = $region25
    $region24: #{featurizer_forward.1} parent=1 // pred_region
      %1419 = dma.done [#allocation4], 96
    $region25: #{featurizer_forward.1} parent=1 // pred_fallthru
      _
    %1420 = vsyncpa [#allocation4], 1

</llo_original>
